<compile_context>
chip_gen: v5e
topology: v5e:2x2
jax: 0.10.0
libtpu: 0.0.40
codegen_flags: <defaults>
</compile_context>

<pallas_src>
import numpy as np
import jax
import jax.numpy as jnp
from jax.experimental import pallas as pl
from jax.experimental.pallas import tpu as pltpu


def _log_sigmoid(x):
    # numerically stable log(sigmoid(x)) = min(x, 0) - log1p(exp(-|x|))
    return jnp.minimum(x, 0.0) - jnp.log1p(jnp.exp(-jnp.abs(x)))


def _tree_sum(terms):
    # pairwise reduction: dependent-add depth ceil(log2 n) instead of n-1
    while len(terms) > 1:
        nxt = [terms[i] + terms[i + 1] for i in range(0, len(terms) - 1, 2)]
        if len(terms) % 2:
            nxt.append(terms[-1])
        terms = nxt
    return terms[0]


def sgns_fused_kernel(iwords_ref, owords_ref, fakes_ref, iemb_ref, oemb_ref, out_ref):
    """Fused one-hot-gather + SGNS loss, batch-vectorized.

    iwords_ref: VMEM (B, 1) int32  center-word ids
    owords_ref: VMEM (B, 1) int32  context-word ids
    fakes_ref : VMEM (B, K) int32  negative-sample ids
    iemb_ref  : VMEM (V, D) f32    input-embedding table (resident)
    oemb_ref  : VMEM (V, D) f32    output-embedding table (resident)
    out_ref   : VMEM (1, 1) f32    scalar loss
    """
    B = iwords_ref.shape[0]
    K = fakes_ref.shape[1]
    V = iemb_ref.shape[0]
    f32 = jnp.float32

    # (B, V) vocab-index iota along the lane axis.
    vocab_iota = jax.lax.broadcasted_iota(jnp.int32, (B, V), 1)

    # One-hot selectors (B, V); lane-broadcast of the (B, 1) id columns.
    onehot_i = (vocab_iota == iwords_ref[...]).astype(f32)
    onehot_o = (vocab_iota == owords_ref[...]).astype(f32)

    # Multi-hot count matrix for the K negatives (preserves duplicates), tree-summed.
    counts = _tree_sum(
        [(vocab_iota == fakes_ref[:, k:k + 1]).astype(f32) for k in range(K)]
    )  # (B, V)

    # Gathers as MXU matmuls over the V contraction dim (exact f32 via HIGHEST).
    hi = jax.lax.Precision.HIGHEST
    iembs = jnp.dot(onehot_i, iemb_ref[...], preferred_element_type=f32, precision=hi)
    oembs = jnp.dot(onehot_o, oemb_ref[...], preferred_element_type=f32, precision=hi)
    nsum = jnp.dot(counts, oemb_ref[...], preferred_element_type=f32, precision=hi)

    # Batched scores: two (B, D) multiplies + two lane reductions to (B, 1).
    pos_score = jnp.sum(iembs * oembs, axis=1, keepdims=True)
    neg_score = jnp.sum(iembs * nsum, axis=1, keepdims=True)

    # Batched log-sigmoid (2 EUP pushes on full blocks) + one sublane reduce.
    per_example = _log_sigmoid(pos_score) + _log_sigmoid(-neg_score)  # (B, 1)
    out_ref[...] = -jnp.sum(per_example, axis=0, keepdims=True)       # (1, 1)


def word2vec_loss_pallas(iwords, owords, fakewords, iemb_w, oemb_w):
    """iwords/owords: (B,) int32, fakewords: (B, K) int32, tables: (V, D) f32 -> scalar."""
    V = iemb_w.shape[0]
    # Clamp ids (PyTorch embedding would reject OOB ids; here it also keeps the
    # one-hot gather semantics well-defined).
    iwords = jnp.clip(jnp.asarray(iwords, jnp.int32), 0, V - 1).reshape(-1, 1)
    owords = jnp.clip(jnp.asarray(owords, jnp.int32), 0, V - 1).reshape(-1, 1)
    fakewords = jnp.clip(jnp.asarray(fakewords, jnp.int32), 0, V - 1)

    out = pl.pallas_call(
        sgns_fused_kernel,
        out_shape=jax.ShapeDtypeStruct((1, 1), jnp.float32),
        in_specs=[
            pl.BlockSpec(memory_space=pltpu.MemorySpace.VMEM),   # iwords    (B, 1)
            pl.BlockSpec(memory_space=pltpu.MemorySpace.VMEM),   # owords    (B, 1)
            pl.BlockSpec(memory_space=pltpu.MemorySpace.VMEM),   # fakewords (B, K)
            pl.BlockSpec(memory_space=pltpu.MemorySpace.VMEM),   # iemb table (resident)
            pl.BlockSpec(memory_space=pltpu.MemorySpace.VMEM),   # oemb table (resident)
        ],
        out_specs=pl.BlockSpec(memory_space=pltpu.MemorySpace.VMEM),
    )(
        iwords,
        owords,
        fakewords,
        iemb_w.astype(jnp.float32),
        oemb_w.astype(jnp.float32),
    )
    return out[0, 0]


class Word2VecPallas:
    """JAX/Pallas port of the Word2Vec module's forward pass."""

    def __init__(self, count, vocab_size=256, emb_dim=32,
                 num_negs=10, batch_size=8, seed=0):
        self.vocab_size = vocab_size
        self.emb_dim = emb_dim
        self.num_negs = num_negs
        self.batch_size = batch_size

        key = jax.random.PRNGKey(seed)
        k_iemb, self.k_neg = jax.random.split(key)
        initrange = 0.5 / emb_dim
        # nn.Embedding weight init: iemb ~ U(-initrange, initrange), oemb = 0
        self.iemb_w = jax.random.uniform(
            k_iemb, (vocab_size, emb_dim), jnp.float32,
            minval=-initrange, maxval=initrange)
        self.oemb_w = jnp.zeros((vocab_size, emb_dim), jnp.float32)

        self.count = count
        self.sample_table = self._init_sample_table()
        self._step = 0  # so each forward() draws fresh negatives

    def _init_sample_table(self):
        # mirrors init_sample_table (raw freq used as repetition count)
        freq_count = [ele[1] for ele in self.count]
        sample_table = []
        for idx, x in enumerate(freq_count):
            sample_table += [idx] * int(x)
        return np.array(sample_table, dtype=np.int32)

    def _sample_negatives(self):
        # deterministic replacement for np.random.choice(sample_table, (B, K))
        tbl = jnp.asarray(self.sample_table)
        key = jax.random.fold_in(self.k_neg, self._step)
        self._step += 1
        idx = jax.random.randint(key, (self.batch_size, self.num_negs), 0, tbl.shape[0])
        return tbl[idx].astype(jnp.int32)                    # (B, K)

    def forward(self, iwords, owords):
        iwords = jnp.asarray(iwords, jnp.int32)
        owords = jnp.asarray(owords, jnp.int32)
        fakewords = self._sample_negatives()
        loss = word2vec_loss_pallas(iwords, owords, fakewords, self.iemb_w, self.oemb_w)
        return loss, fakewords


def _reference_loss(iwords, owords, fakewords, iemb_w, oemb_w):
    # pure-JAX reference matching the original PyTorch reduction order
    iembs = jnp.take(iemb_w, iwords, axis=0)                 # (B, D)
    oembs = jnp.take(oemb_w, owords, axis=0)                 # (B, D)
    neg = jnp.take(oemb_w, fakewords, axis=0)                # (B, K, D)
    pos_ls = jax.nn.log_sigmoid(jnp.sum(iembs * oembs, axis=1))
    neg_score = jnp.sum(neg * iembs[:, None, :], axis=-1)    # (B, K)
    neg_ls = jax.nn.log_sigmoid(-jnp.sum(neg_score, axis=1))
    return -jnp.sum(pos_ls + neg_ls)


if __name__ == "__main__":
    VOCAB, EMB, BATCH, NEGS = 256, 32, 8, 10

    # synthetic (word, frequency) counts, highest first — built in-script
    count = [(f"w{i}", VOCAB - i) for i in range(VOCAB)]

    model = Word2VecPallas(count, vocab_size=VOCAB, emb_dim=EMB,
                           num_negs=NEGS, batch_size=BATCH, seed=0)

    key = jax.random.PRNGKey(0)
    k_i, k_o, k_ti, k_to = jax.random.split(key, 4)
    iwords = jax.random.randint(k_i, (BATCH,), 0, VOCAB)
    owords = jax.random.randint(k_o, (BATCH,), 0, VOCAB)

    # 1) module forward (oemb zero-initialized, exactly as in the PyTorch reference)
    loss, fakewords = model.forward(iwords, owords)
    loss = jax.block_until_ready(loss)
    ref = _reference_loss(iwords, owords, fakewords, model.iemb_w, model.oemb_w)
    assert jnp.allclose(loss, ref, rtol=1e-4, atol=1e-4), (loss, ref)

    # 2) standalone kernel check with non-trivial random tables so the one-hot MXU
    #    gathers, duplicate-negative counts and reassociated negative sum are exercised.
    #    (Reassociated summation order differs from the PyTorch reference; f32
    #    accumulation keeps the difference well inside 1e-4 at these sizes.)
    iemb_rand = 0.1 * jax.random.normal(k_ti, (VOCAB, EMB), jnp.float32)
    oemb_rand = 0.1 * jax.random.normal(k_to, (VOCAB, EMB), jnp.float32)
    loss2 = word2vec_loss_pallas(iwords, owords, fakewords, iemb_rand, oemb_rand)
    loss2 = jax.block_until_ready(loss2)
    ref2 = _reference_loss(iwords, owords, fakewords, iemb_rand, oemb_rand)
    assert jnp.allclose(loss2, ref2, rtol=1e-4, atol=1e-4), (loss2, ref2)

    print("KERNEL_OK")
</pallas_src>

<mosaic_0001>
module attributes {stable_mosaic.version = 11 : i64} {
  func.func @sgns_fused_kernel(%arg0: memref<8x1xi32, #tpu.memory_space<vmem>>, %arg1: memref<8x1xi32, #tpu.memory_space<vmem>>, %arg2: memref<8x10xi32, #tpu.memory_space<vmem>>, %arg3: memref<256x32xf32, #tpu.memory_space<vmem>>, %arg4: memref<256x32xf32, #tpu.memory_space<vmem>>, %arg5: memref<1x1xf32, #tpu.memory_space<vmem>>) attributes {dimension_semantics = [], scalar_prefetch = 0 : i64, scratch_operands = 0 : i64, tpu.core_type = #tpu.core_type<tc>} {
    %0 = tpu.iota {dimensions = array<i32: 1>} : vector<8x256xi32>
    %c0 = arith.constant 0 : index
    %c0_0 = arith.constant 0 : index
    %1 = vector.load %arg0[%c0, %c0_0] : memref<8x1xi32, #tpu.memory_space<vmem>>, vector<8x1xi32>
    %2 = vector.broadcast %1 : vector<8x1xi32> to vector<8x256xi32>
    %3 = arith.cmpi eq, %0, %2 : vector<8x256xi32>
    %4 = arith.extui %3 : vector<8x256xi1> to vector<8x256xi32>
    %5 = arith.sitofp %4 : vector<8x256xi32> to vector<8x256xf32>
    %c0_1 = arith.constant 0 : index
    %c0_2 = arith.constant 0 : index
    %6 = vector.load %arg1[%c0_1, %c0_2] : memref<8x1xi32, #tpu.memory_space<vmem>>, vector<8x1xi32>
    %7 = vector.broadcast %6 : vector<8x1xi32> to vector<8x256xi32>
    %8 = arith.cmpi eq, %0, %7 : vector<8x256xi32>
    %9 = arith.extui %8 : vector<8x256xi1> to vector<8x256xi32>
    %10 = arith.sitofp %9 : vector<8x256xi32> to vector<8x256xf32>
    %c0_3 = arith.constant 0 : index
    %c0_4 = arith.constant 0 : index
    %11 = vector.load %arg2[%c0_3, %c0_4] : memref<8x10xi32, #tpu.memory_space<vmem>>, vector<8x1xi32>
    %12 = vector.broadcast %11 : vector<8x1xi32> to vector<8x256xi32>
    %13 = arith.cmpi eq, %0, %12 : vector<8x256xi32>
    %14 = arith.extui %13 : vector<8x256xi1> to vector<8x256xi32>
    %15 = arith.sitofp %14 : vector<8x256xi32> to vector<8x256xf32>
    %c0_5 = arith.constant 0 : index
    %c1 = arith.constant 1 : index
    %16 = vector.load %arg2[%c0_5, %c1] : memref<8x10xi32, #tpu.memory_space<vmem>>, vector<8x1xi32>
    %17 = vector.broadcast %16 : vector<8x1xi32> to vector<8x256xi32>
    %18 = arith.cmpi eq, %0, %17 : vector<8x256xi32>
    %19 = arith.extui %18 : vector<8x256xi1> to vector<8x256xi32>
    %20 = arith.sitofp %19 : vector<8x256xi32> to vector<8x256xf32>
    %c0_6 = arith.constant 0 : index
    %c2 = arith.constant 2 : index
    %21 = vector.load %arg2[%c0_6, %c2] : memref<8x10xi32, #tpu.memory_space<vmem>>, vector<8x1xi32>
    %22 = vector.broadcast %21 : vector<8x1xi32> to vector<8x256xi32>
    %23 = arith.cmpi eq, %0, %22 : vector<8x256xi32>
    %24 = arith.extui %23 : vector<8x256xi1> to vector<8x256xi32>
    %25 = arith.sitofp %24 : vector<8x256xi32> to vector<8x256xf32>
    %c0_7 = arith.constant 0 : index
    %c3 = arith.constant 3 : index
    %26 = vector.load %arg2[%c0_7, %c3] : memref<8x10xi32, #tpu.memory_space<vmem>>, vector<8x1xi32>
    %27 = vector.broadcast %26 : vector<8x1xi32> to vector<8x256xi32>
    %28 = arith.cmpi eq, %0, %27 : vector<8x256xi32>
    %29 = arith.extui %28 : vector<8x256xi1> to vector<8x256xi32>
    %30 = arith.sitofp %29 : vector<8x256xi32> to vector<8x256xf32>
    %c0_8 = arith.constant 0 : index
    %c4 = arith.constant 4 : index
    %31 = vector.load %arg2[%c0_8, %c4] : memref<8x10xi32, #tpu.memory_space<vmem>>, vector<8x1xi32>
    %32 = vector.broadcast %31 : vector<8x1xi32> to vector<8x256xi32>
    %33 = arith.cmpi eq, %0, %32 : vector<8x256xi32>
    %34 = arith.extui %33 : vector<8x256xi1> to vector<8x256xi32>
    %35 = arith.sitofp %34 : vector<8x256xi32> to vector<8x256xf32>
    %c0_9 = arith.constant 0 : index
    %c5 = arith.constant 5 : index
    %36 = vector.load %arg2[%c0_9, %c5] : memref<8x10xi32, #tpu.memory_space<vmem>>, vector<8x1xi32>
    %37 = vector.broadcast %36 : vector<8x1xi32> to vector<8x256xi32>
    %38 = arith.cmpi eq, %0, %37 : vector<8x256xi32>
    %39 = arith.extui %38 : vector<8x256xi1> to vector<8x256xi32>
    %40 = arith.sitofp %39 : vector<8x256xi32> to vector<8x256xf32>
    %c0_10 = arith.constant 0 : index
    %c6 = arith.constant 6 : index
    %41 = vector.load %arg2[%c0_10, %c6] : memref<8x10xi32, #tpu.memory_space<vmem>>, vector<8x1xi32>
    %42 = vector.broadcast %41 : vector<8x1xi32> to vector<8x256xi32>
    %43 = arith.cmpi eq, %0, %42 : vector<8x256xi32>
    %44 = arith.extui %43 : vector<8x256xi1> to vector<8x256xi32>
    %45 = arith.sitofp %44 : vector<8x256xi32> to vector<8x256xf32>
    %c0_11 = arith.constant 0 : index
    %c7 = arith.constant 7 : index
    %46 = vector.load %arg2[%c0_11, %c7] : memref<8x10xi32, #tpu.memory_space<vmem>>, vector<8x1xi32>
    %47 = vector.broadcast %46 : vector<8x1xi32> to vector<8x256xi32>
    %48 = arith.cmpi eq, %0, %47 : vector<8x256xi32>
    %49 = arith.extui %48 : vector<8x256xi1> to vector<8x256xi32>
    %50 = arith.sitofp %49 : vector<8x256xi32> to vector<8x256xf32>
    %c0_12 = arith.constant 0 : index
    %c8 = arith.constant 8 : index
    %51 = vector.load %arg2[%c0_12, %c8] : memref<8x10xi32, #tpu.memory_space<vmem>>, vector<8x1xi32>
    %52 = vector.broadcast %51 : vector<8x1xi32> to vector<8x256xi32>
    %53 = arith.cmpi eq, %0, %52 : vector<8x256xi32>
    %54 = arith.extui %53 : vector<8x256xi1> to vector<8x256xi32>
    %55 = arith.sitofp %54 : vector<8x256xi32> to vector<8x256xf32>
    %c0_13 = arith.constant 0 : index
    %c9 = arith.constant 9 : index
    %56 = vector.load %arg2[%c0_13, %c9] : memref<8x10xi32, #tpu.memory_space<vmem>>, vector<8x1xi32>
    %57 = vector.broadcast %56 : vector<8x1xi32> to vector<8x256xi32>
    %58 = arith.cmpi eq, %0, %57 : vector<8x256xi32>
    %59 = arith.extui %58 : vector<8x256xi1> to vector<8x256xi32>
    %60 = arith.sitofp %59 : vector<8x256xi32> to vector<8x256xf32>
    %61 = arith.addf %15, %20 : vector<8x256xf32>
    %62 = arith.addf %25, %30 : vector<8x256xf32>
    %63 = arith.addf %35, %40 : vector<8x256xf32>
    %64 = arith.addf %45, %50 : vector<8x256xf32>
    %65 = arith.addf %55, %60 : vector<8x256xf32>
    %66 = arith.addf %61, %62 : vector<8x256xf32>
    %67 = arith.addf %63, %64 : vector<8x256xf32>
    %68 = arith.addf %66, %67 : vector<8x256xf32>
    %69 = arith.addf %68, %65 : vector<8x256xf32>
    %c0_14 = arith.constant 0 : index
    %c0_15 = arith.constant 0 : index
    %70 = vector.load %arg3[%c0_14, %c0_15] : memref<256x32xf32, #tpu.memory_space<vmem>>, vector<256x32xf32>
    %cst = arith.constant dense<0.000000e+00> : vector<8x32xf32>
    %71 = tpu.matmul %5, %70, %cst {dimension_numbers = #tpu.dot_dimension_numbers<[1], [0], [0], [1], [0, 0, 1, 1], [], []>, precision = #tpu.contract_precision<fp32>} : vector<8x256xf32>, vector<256x32xf32>, vector<8x32xf32> -> vector<8x32xf32>
    %c0_16 = arith.constant 0 : index
    %c0_17 = arith.constant 0 : index
    %72 = vector.load %arg4[%c0_16, %c0_17] : memref<256x32xf32, #tpu.memory_space<vmem>>, vector<256x32xf32>
    %cst_18 = arith.constant dense<0.000000e+00> : vector<8x32xf32>
    %73 = tpu.matmul %10, %72, %cst_18 {dimension_numbers = #tpu.dot_dimension_numbers<[1], [0], [0], [1], [0, 0, 1, 1], [], []>, precision = #tpu.contract_precision<fp32>} : vector<8x256xf32>, vector<256x32xf32>, vector<8x32xf32> -> vector<8x32xf32>
    %c0_19 = arith.constant 0 : index
    %c0_20 = arith.constant 0 : index
    %74 = vector.load %arg4[%c0_19, %c0_20] : memref<256x32xf32, #tpu.memory_space<vmem>>, vector<256x32xf32>
    %cst_21 = arith.constant dense<0.000000e+00> : vector<8x32xf32>
    %75 = tpu.matmul %69, %74, %cst_21 {dimension_numbers = #tpu.dot_dimension_numbers<[1], [0], [0], [1], [0, 0, 1, 1], [], []>, precision = #tpu.contract_precision<fp32>} : vector<8x256xf32>, vector<256x32xf32>, vector<8x32xf32> -> vector<8x32xf32>
    %76 = arith.mulf %71, %73 : vector<8x32xf32>
    %cst_22 = arith.constant dense<0.000000e+00> : vector<8xf32>
    %77 = vector.multi_reduction <add>, %76, %cst_22 [1] : vector<8x32xf32> to vector<8xf32>
    %78 = vector.shape_cast %77 : vector<8xf32> to vector<8x1xf32>
    %79 = arith.mulf %71, %75 : vector<8x32xf32>
    %cst_23 = arith.constant dense<0.000000e+00> : vector<8xf32>
    %80 = vector.multi_reduction <add>, %79, %cst_23 [1] : vector<8x32xf32> to vector<8xf32>
    %81 = vector.shape_cast %80 : vector<8xf32> to vector<8x1xf32>
    %cst_24 = arith.constant 0.000000e+00 : f32
    %82 = vector.broadcast %cst_24 : f32 to vector<8x1xf32>
    %83 = arith.minimumf %78, %82 : vector<8x1xf32>
    %84 = math.absf %78 : vector<8x1xf32>
    %cst_25 = arith.constant 0.000000e+00 : f32
    %85 = vector.broadcast %cst_25 : f32 to vector<8x1xf32>
    %86 = arith.subf %85, %84 : vector<8x1xf32>
    %87 = math.exp %86 : vector<8x1xf32>
    %88 = math.log1p %87 : vector<8x1xf32>
    %89 = arith.subf %83, %88 : vector<8x1xf32>
    %cst_26 = arith.constant 0.000000e+00 : f32
    %90 = vector.broadcast %cst_26 : f32 to vector<8x1xf32>
    %91 = arith.subf %90, %81 : vector<8x1xf32>
    %cst_27 = arith.constant 0.000000e+00 : f32
    %92 = vector.broadcast %cst_27 : f32 to vector<8x1xf32>
    %93 = arith.minimumf %91, %92 : vector<8x1xf32>
    %94 = math.absf %91 : vector<8x1xf32>
    %cst_28 = arith.constant 0.000000e+00 : f32
    %95 = vector.broadcast %cst_28 : f32 to vector<8x1xf32>
    %96 = arith.subf %95, %94 : vector<8x1xf32>
    %97 = math.exp %96 : vector<8x1xf32>
    %98 = math.log1p %97 : vector<8x1xf32>
    %99 = arith.subf %93, %98 : vector<8x1xf32>
    %100 = arith.addf %89, %99 : vector<8x1xf32>
    %cst_29 = arith.constant dense<0.000000e+00> : vector<1xf32>
    %101 = vector.multi_reduction <add>, %100, %cst_29 [0] : vector<8x1xf32> to vector<1xf32>
    %102 = vector.shape_cast %101 : vector<1xf32> to vector<1x1xf32>
    %cst_30 = arith.constant 0.000000e+00 : f32
    %103 = vector.broadcast %cst_30 : f32 to vector<1x1xf32>
    %104 = arith.subf %103, %102 : vector<1x1xf32>
    %c0_31 = arith.constant 0 : index
    %c0_32 = arith.constant 0 : index
    %105 = vector.load %arg5[%c0_31, %c0_32] : memref<1x1xf32, #tpu.memory_space<vmem>>, vector<1x1xf32>
    tpu.vector_store %arg5[%c0_31, %c0_32], %104 {strides = array<i32>} : memref<1x1xf32, #tpu.memory_space<vmem>>, vector<1x1xf32>,
    return
  }
}

</mosaic_0001>

<llo_original>
// kernel: tpu_custom_call.1
$region0: #{tpu_custom_call.1}
  #allocation0 [shape = 'u32[]', space=smem, size = 0x4, offset = 0x4, fixed_abs, tag = 'smem constant byte address 0x4 - core index']
  #allocation1 [shape = 'u32[72,128]{1,0:T(1,128)}', space=vmem, size = 0x9000, scoped, tag = 'internal scratch']
  %s0 = inlined_call_operand.vmem [shape: s32[8,1], index: 0, kind: input, shape index: {}]
  %s1 = inlined_call_operand.vmem [shape: s32[8,1], index: 1, kind: input, shape index: {}]
  %s2 = inlined_call_operand.vmem [shape: s32[8,10], index: 2, kind: input, shape index: {}]
  %s3 = inlined_call_operand.vmem [shape: f32[256,32], index: 3, kind: input, shape index: {}]
  %s4 = inlined_call_operand.vmem [shape: f32[256,32], index: 4, kind: input, shape index: {}]
  %s5 = inlined_call_operand.hbm [shape: f32[1,1], index: 5, kind: output, shape index: {}]
  %s6 = sld [smem:[#allocation0]]
  $region30: #{tpu_custom_call.1} parent=0
    _
  %s8 = ssub.s32 1, %s6
  %s9 = scalar_select 0, %s8, %s6
  $region1: #{tpu_custom_call.1} parent=0
    #allocation2 [shape = 'u8[512]{0}', space=vmem, size = 0x400, scoped, tag = 'output window, operand 0, single buffered']
    #allocation3 [shape = 's32[1]{0}', space=sflag, size = 0x4, scoped, tag = 'scoped memory for tpu_custom_call.1']
    %10 = vsyncpa [#allocation3], 0
    // Predicated region
    $region2: #{tpu_custom_call.1} parent=1 // pred_check
      _
    $region3: #{tpu_custom_call.1} parent=1 // pred_check_branch
      %12 = sbr.rel (0) target = $region5
    $region4: #{tpu_custom_call.1} parent=1 // pred_region
      _
    $region5: #{tpu_custom_call.1} parent=1 // pred_fallthru
      _
    // Predicated region
    $region6: #{tpu_custom_call.1} parent=1 // pred_check
      _
    $region7: #{tpu_custom_call.1} parent=1 // pred_check_branch
      %14 = sbr.rel (0) target = $region9
    $region8: #{tpu_custom_call.1} parent=1 // pred_region
      _
    $region9: #{tpu_custom_call.1} parent=1 // pred_fallthru
      _
    // Predicated region
    $region10: #{tpu_custom_call.1} parent=1 // pred_check
      _
    $region11: #{tpu_custom_call.1} parent=1 // pred_check_branch
      %16 = sbr.rel (0) target = $region13
    $region12: #{tpu_custom_call.1} parent=1 // pred_region
      _
    $region13: #{tpu_custom_call.1} parent=1 // pred_fallthru
      _
    // Predicated region
    $region14: #{tpu_custom_call.1} parent=1 // pred_check
      _
    $region15: #{tpu_custom_call.1} parent=1 // pred_check_branch
      %18 = sbr.rel (0) target = $region17
    $region16: #{tpu_custom_call.1} parent=1 // pred_region
      _
    $region17: #{tpu_custom_call.1} parent=1 // pred_fallthru
      _
    // Predicated region
    $region18: #{tpu_custom_call.1} parent=1 // pred_check
      _
    $region19: #{tpu_custom_call.1} parent=1 // pred_check_branch
      %20 = sbr.rel (0) target = $region21
    $region20: #{tpu_custom_call.1} parent=1 // pred_region
      _
    $region21: #{tpu_custom_call.1} parent=1 // pred_fallthru
      _
    %v21 = vlaneseq
    %v22 = vand.u32 %v21, 127
    %v23 = vadd.s32 %v22, 128
    %v24 = vld [vmem:[%s0] sm:$0xff]
    %25 = vset.pattern.permute.xlu0 0
    %26 = vperm.xlu0 %25, %v24
    %v27 = vpop.permute.xlu0 %26
    %vm28 = vcmp.eq.s32.totalorder %v22, %v27
    %vm29 = vcmp.eq.s32.totalorder %v23, %v27
    %v30 = vsel %vm28, 1, 0
    %v31 = vsel %vm29, 1, 0
    %v32 = vcvt.s32.f32 %v30
    %v33 = vcvt.s32.f32 %v31
    %v34 = vld [vmem:[%s1] sm:$0xff]
    %35 = vset.pattern.permute.xlu0 0
    %36 = vperm.xlu0 %35, %v34
    %v37 = vpop.permute.xlu0 %36
    %vm38 = vcmp.eq.s32.totalorder %v22, %v37
    %vm39 = vcmp.eq.s32.totalorder %v23, %v37
    %v40 = vsel %vm38, 1, 0
    %v41 = vsel %vm39, 1, 0
    %v42 = vcvt.s32.f32 %v40
    %v43 = vcvt.s32.f32 %v41
    %v44 = vld [vmem:[%s2] sm:$0xff]
    %45 = vset.pattern.permute.xlu0 0
    %46 = vperm.xlu0 %45, %v44
    %v47 = vpop.permute.xlu0 %46
    %vm48 = vcmp.eq.s32.totalorder %v22, %v47
    %vm49 = vcmp.eq.s32.totalorder %v23, %v47
    %v50 = vsel %vm48, 1, 0
    %v51 = vsel %vm49, 1, 0
    %v52 = vcvt.s32.f32 %v50
    %v53 = vcvt.s32.f32 %v51
    %54 = vset.pattern.permute.xlu0 1
    %55 = vperm.xlu0 %54, %v44
    %v56 = vpop.permute.xlu0 %55
    %vm57 = vcmp.eq.s32.totalorder %v22, %v56
    %vm58 = vcmp.eq.s32.totalorder %v23, %v56
    %v59 = vsel %vm57, 1, 0
    %v60 = vsel %vm58, 1, 0
    %v61 = vcvt.s32.f32 %v59
    %v62 = vcvt.s32.f32 %v60
    %63 = vset.pattern.permute.xlu0 2
    %64 = vperm.xlu0 %63, %v44
    %v65 = vpop.permute.xlu0 %64
    %vm66 = vcmp.eq.s32.totalorder %v22, %v65
    %vm67 = vcmp.eq.s32.totalorder %v23, %v65
    %v68 = vsel %vm66, 1, 0
    %v69 = vsel %vm67, 1, 0
    %v70 = vcvt.s32.f32 %v68
    %v71 = vcvt.s32.f32 %v69
    %72 = vset.pattern.permute.xlu0 3
    %73 = vperm.xlu0 %72, %v44
    %v74 = vpop.permute.xlu0 %73
    %vm75 = vcmp.eq.s32.totalorder %v22, %v74
    %vm76 = vcmp.eq.s32.totalorder %v23, %v74
    %v77 = vsel %vm75, 1, 0
    %v78 = vsel %vm76, 1, 0
    %v79 = vcvt.s32.f32 %v77
    %v80 = vcvt.s32.f32 %v78
    %81 = vset.pattern.permute.xlu0 4
    %82 = vperm.xlu0 %81, %v44
    %v83 = vpop.permute.xlu0 %82
    %vm84 = vcmp.eq.s32.totalorder %v22, %v83
    %vm85 = vcmp.eq.s32.totalorder %v23, %v83
    %v86 = vsel %vm84, 1, 0
    %v87 = vsel %vm85, 1, 0
    %v88 = vcvt.s32.f32 %v86
    %v89 = vcvt.s32.f32 %v87
    %90 = vset.pattern.permute.xlu0 5
    %91 = vperm.xlu0 %90, %v44
    %v92 = vpop.permute.xlu0 %91
    %vm93 = vcmp.eq.s32.totalorder %v22, %v92
    %vm94 = vcmp.eq.s32.totalorder %v23, %v92
    %v95 = vsel %vm93, 1, 0
    %v96 = vsel %vm94, 1, 0
    %v97 = vcvt.s32.f32 %v95
    %v98 = vcvt.s32.f32 %v96
    %99 = vset.pattern.permute.xlu0 6
    %100 = vperm.xlu0 %99, %v44
    %v101 = vpop.permute.xlu0 %100
    %vm102 = vcmp.eq.s32.totalorder %v22, %v101
    %vm103 = vcmp.eq.s32.totalorder %v23, %v101
    %v104 = vsel %vm102, 1, 0
    %v105 = vsel %vm103, 1, 0
    %v106 = vcvt.s32.f32 %v104
    %v107 = vcvt.s32.f32 %v105
    %108 = vset.pattern.permute.xlu0 7
    %109 = vperm.xlu0 %108, %v44
    %v110 = vpop.permute.xlu0 %109
    %vm111 = vcmp.eq.s32.totalorder %v22, %v110
    %vm112 = vcmp.eq.s32.totalorder %v23, %v110
    %v113 = vsel %vm111, 1, 0
    %v114 = vsel %vm112, 1, 0
    %v115 = vcvt.s32.f32 %v113
    %v116 = vcvt.s32.f32 %v114
    %117 = vset.pattern.permute.xlu0 8
    %118 = vperm.xlu0 %117, %v44
    %v119 = vpop.permute.xlu0 %118
    %vm120 = vcmp.eq.s32.totalorder %v22, %v119
    %vm121 = vcmp.eq.s32.totalorder %v23, %v119
    %v122 = vsel %vm120, 1, 0
    %v123 = vsel %vm121, 1, 0
    %v124 = vcvt.s32.f32 %v122
    %v125 = vcvt.s32.f32 %v123
    %126 = vset.pattern.permute.xlu0 9
    %127 = vperm.xlu0 %126, %v44
    %v128 = vpop.permute.xlu0 %127
    %vm129 = vcmp.eq.s32.totalorder %v22, %v128
    %vm130 = vcmp.eq.s32.totalorder %v23, %v128
    %v131 = vsel %vm129, 1, 0
    %v132 = vsel %vm130, 1, 0
    %v133 = vcvt.s32.f32 %v131
    %v134 = vcvt.s32.f32 %v132
    %v135 = vadd.f32 %v52, %v61
    %v136 = vadd.f32 %v53, %v62
    %v137 = vadd.f32 %v70, %v79
    %v138 = vadd.f32 %v71, %v80
    %v139 = vadd.f32 %v88, %v97
    %v140 = vadd.f32 %v89, %v98
    %v141 = vadd.f32 %v106, %v115
    %v142 = vadd.f32 %v107, %v116
    %v143 = vadd.f32 %v124, %v133
    %v144 = vadd.f32 %v125, %v134
    %v145 = vadd.f32 %v135, %v137
    %v146 = vadd.f32 %v136, %v138
    %v147 = vadd.f32 %v139, %v141
    %v148 = vadd.f32 %v140, %v142
    %v149 = vadd.f32 %v145, %v147
    %v150 = vadd.f32 %v146, %v148
    %v151 = vadd.f32 %v149, %v143
    %v152 = vadd.f32 %v150, %v144
    %v153 = vld [vmem:[%s3] sm:$0xff]
    %v154 = vld [vmem:[%s3 + $0x8] sm:$0xff]
    %v155 = vld [vmem:[%s3 + $0x10] sm:$0xff]
    %v156 = vld [vmem:[%s3 + $0x18] sm:$0xff]
    %v157 = vld [vmem:[%s3 + $0x20] sm:$0xff]
    %v158 = vld [vmem:[%s3 + $0x28] sm:$0xff]
    %v159 = vld [vmem:[%s3 + $0x30] sm:$0xff]
    %v160 = vld [vmem:[%s3 + $0x38] sm:$0xff]
    %v161 = vld [vmem:[%s3 + $0x40] sm:$0xff]
    %v162 = vld [vmem:[%s3 + $0x48] sm:$0xff]
    %v163 = vld [vmem:[%s3 + $0x50] sm:$0xff]
    %v164 = vld [vmem:[%s3 + $0x58] sm:$0xff]
    %v165 = vld [vmem:[%s3 + $0x60] sm:$0xff]
    %v166 = vld [vmem:[%s3 + $0x68] sm:$0xff]
    %v167 = vld [vmem:[%s3 + $0x70] sm:$0xff]
    %v168 = vld [vmem:[%s3 + $0x78] sm:$0xff]
    %v169 = vld [vmem:[%s3 + $0x80] sm:$0xff]
    %v170 = vld [vmem:[%s3 + $0x88] sm:$0xff]
    %v171 = vld [vmem:[%s3 + $0x90] sm:$0xff]
    %v172 = vld [vmem:[%s3 + $0x98] sm:$0xff]
    %v173 = vld [vmem:[%s3 + $0xa0] sm:$0xff]
    %v174 = vld [vmem:[%s3 + $0xa8] sm:$0xff]
    %v175 = vld [vmem:[%s3 + $0xb0] sm:$0xff]
    %v176 = vld [vmem:[%s3 + $0xb8] sm:$0xff]
    %v177 = vld [vmem:[%s3 + $0xc0] sm:$0xff]
    %v178 = vld [vmem:[%s3 + $0xc8] sm:$0xff]
    %v179 = vld [vmem:[%s3 + $0xd0] sm:$0xff]
    %v180 = vld [vmem:[%s3 + $0xd8] sm:$0xff]
    %v181 = vld [vmem:[%s3 + $0xe0] sm:$0xff]
    %v182 = vld [vmem:[%s3 + $0xe8] sm:$0xff]
    %v183 = vld [vmem:[%s3 + $0xf0] sm:$0xff]
    %v184 = vld [vmem:[%s3 + $0xf8] sm:$0xff]
    %v185 = vand.u32 %v168, 4294901760
    %186 = vmatpush.msra.mxu0 %v185
    %v187 = vand.u32 %v167, 4294901760
    %188 = vmatpush.msra.mxu0 %v187
    %v189 = vand.u32 %v166, 4294901760
    %190 = vmatpush.msra.mxu0 %v189
    %v191 = vand.u32 %v165, 4294901760
    %192 = vmatpush.msra.mxu0 %v191
    %v193 = vand.u32 %v164, 4294901760
    %194 = vmatpush.msra.mxu0 %v193
    %v195 = vand.u32 %v163, 4294901760
    %196 = vmatpush.msra.mxu0 %v195
    %v197 = vand.u32 %v162, 4294901760
    %198 = vmatpush.msra.mxu0 %v197
    %v199 = vand.u32 %v161, 4294901760
    %200 = vmatpush.msra.mxu0 %v199
    %v201 = vand.u32 %v160, 4294901760
    %202 = vmatpush.msra.mxu0 %v201
    %v203 = vand.u32 %v159, 4294901760
    %204 = vmatpush.msra.mxu0 %v203
    %v205 = vand.u32 %v158, 4294901760
    %206 = vmatpush.msra.mxu0 %v205
    %v207 = vand.u32 %v157, 4294901760
    %208 = vmatpush.msra.mxu0 %v207
    %v209 = vand.u32 %v156, 4294901760
    %210 = vmatpush.msra.mxu0 %v209
    %v211 = vand.u32 %v155, 4294901760
    %212 = vmatpush.msra.mxu0 %v211
    %v213 = vand.u32 %v154, 4294901760
    %214 = vmatpush.msra.mxu0 %v213
    %v215 = vand.u32 %v153, 4294901760
    %216 = vmatpush.msra.mxu0 %v215
    %v217 = vand.u32 %v32, 4294901760
    %v218 = vsub.f32 %v32, %v217
    %v219 = vand.u32 %v218, 4294901760
    %v220 = vsub.f32 %v218, %v219
    %v221 = vand.u32 %v220, 4294901760
    %222 = vmatmul.f32.gmra.mxu0 %v221
    %v223 = vpop.f32.mrf.mxu0
    %v224 = vadd.f32 0.0, %v223
    %225 = vdwg.mxu0
    %v226 = vand.u32 %v168, 4294901760
    %v227 = vsub.f32 %v168, %v226
    %v228 = vand.u32 %v227, 4294901760
    %v229 = vsub.f32 %v227, %v228
    %v230 = vand.u32 %v229, 4294901760
    %231 = vmatpush.msra.mxu0 %v230
    %v232 = vand.u32 %v167, 4294901760
    %v233 = vsub.f32 %v167, %v232
    %v234 = vand.u32 %v233, 4294901760
    %v235 = vsub.f32 %v233, %v234
    %v236 = vand.u32 %v235, 4294901760
    %237 = vmatpush.msra.mxu0 %v236
    %v238 = vand.u32 %v166, 4294901760
    %v239 = vsub.f32 %v166, %v238
    %v240 = vand.u32 %v239, 4294901760
    %v241 = vsub.f32 %v239, %v240
    %v242 = vand.u32 %v241, 4294901760
    %243 = vmatpush.msra.mxu0 %v242
    %v244 = vand.u32 %v165, 4294901760
    %v245 = vsub.f32 %v165, %v244
    %v246 = vand.u32 %v245, 4294901760
    %v247 = vsub.f32 %v245, %v246
    %v248 = vand.u32 %v247, 4294901760
    %249 = vmatpush.msra.mxu0 %v248
    %v250 = vand.u32 %v164, 4294901760
    %v251 = vsub.f32 %v164, %v250
    %v252 = vand.u32 %v251, 4294901760
    %v253 = vsub.f32 %v251, %v252
    %v254 = vand.u32 %v253, 4294901760
    %255 = vmatpush.msra.mxu0 %v254
    %v256 = vand.u32 %v163, 4294901760
    %v257 = vsub.f32 %v163, %v256
    %v258 = vand.u32 %v257, 4294901760
    %v259 = vsub.f32 %v257, %v258
    %v260 = vand.u32 %v259, 4294901760
    %261 = vmatpush.msra.mxu0 %v260
    %v262 = vand.u32 %v162, 4294901760
    %v263 = vsub.f32 %v162, %v262
    %v264 = vand.u32 %v263, 4294901760
    %v265 = vsub.f32 %v263, %v264
    %v266 = vand.u32 %v265, 4294901760
    %267 = vmatpush.msra.mxu0 %v266
    %v268 = vand.u32 %v161, 4294901760
    %v269 = vsub.f32 %v161, %v268
    %v270 = vand.u32 %v269, 4294901760
    %v271 = vsub.f32 %v269, %v270
    %v272 = vand.u32 %v271, 4294901760
    %273 = vmatpush.msra.mxu0 %v272
    %v274 = vand.u32 %v160, 4294901760
    %v275 = vsub.f32 %v160, %v274
    %v276 = vand.u32 %v275, 4294901760
    %v277 = vsub.f32 %v275, %v276
    %v278 = vand.u32 %v277, 4294901760
    %279 = vmatpush.msra.mxu0 %v278
    %v280 = vand.u32 %v159, 4294901760
    %v281 = vsub.f32 %v159, %v280
    %v282 = vand.u32 %v281, 4294901760
    %v283 = vsub.f32 %v281, %v282
    %v284 = vand.u32 %v283, 4294901760
    %285 = vmatpush.msra.mxu0 %v284
    %v286 = vand.u32 %v158, 4294901760
    %v287 = vsub.f32 %v158, %v286
    %v288 = vand.u32 %v287, 4294901760
    %v289 = vsub.f32 %v287, %v288
    %v290 = vand.u32 %v289, 4294901760
    %291 = vmatpush.msra.mxu0 %v290
    %v292 = vand.u32 %v157, 4294901760
    %v293 = vsub.f32 %v157, %v292
    %v294 = vand.u32 %v293, 4294901760
    %v295 = vsub.f32 %v293, %v294
    %v296 = vand.u32 %v295, 4294901760
    %297 = vmatpush.msra.mxu0 %v296
    %v298 = vand.u32 %v156, 4294901760
    %v299 = vsub.f32 %v156, %v298
    %v300 = vand.u32 %v299, 4294901760
    %v301 = vsub.f32 %v299, %v300
    %v302 = vand.u32 %v301, 4294901760
    %303 = vmatpush.msra.mxu0 %v302
    %v304 = vand.u32 %v155, 4294901760
    %v305 = vsub.f32 %v155, %v304
    %v306 = vand.u32 %v305, 4294901760
    %v307 = vsub.f32 %v305, %v306
    %v308 = vand.u32 %v307, 4294901760
    %309 = vmatpush.msra.mxu0 %v308
    %v310 = vand.u32 %v154, 4294901760
    %v311 = vsub.f32 %v154, %v310
    %v312 = vand.u32 %v311, 4294901760
    %v313 = vsub.f32 %v311, %v312
    %v314 = vand.u32 %v313, 4294901760
    %315 = vmatpush.msra.mxu0 %v314
    %v316 = vand.u32 %v153, 4294901760
    %v317 = vsub.f32 %v153, %v316
    %v318 = vand.u32 %v317, 4294901760
    %v319 = vsub.f32 %v317, %v318
    %v320 = vand.u32 %v319, 4294901760
    %321 = vmatpush.msra.mxu0 %v320
    %v322 = vand.u32 %v32, 4294901760
    %323 = vmatmul.f32.gmra.mxu0 %v322
    %v324 = vpop.f32.mrf.mxu0
    %v325 = vadd.f32 %v224, %v324
    %326 = vdwg.mxu0
    %v327 = vand.u32 %v168, 4294901760
    %v328 = vsub.f32 %v168, %v327
    %329 = vmatpush.msra.mxu0 %v328
    %v330 = vand.u32 %v167, 4294901760
    %v331 = vsub.f32 %v167, %v330
    %332 = vmatpush.msra.mxu0 %v331
    %v333 = vand.u32 %v166, 4294901760
    %v334 = vsub.f32 %v166, %v333
    %335 = vmatpush.msra.mxu0 %v334
    %v336 = vand.u32 %v165, 4294901760
    %v337 = vsub.f32 %v165, %v336
    %338 = vmatpush.msra.mxu0 %v337
    %v339 = vand.u32 %v164, 4294901760
    %v340 = vsub.f32 %v164, %v339
    %341 = vmatpush.msra.mxu0 %v340
    %v342 = vand.u32 %v163, 4294901760
    %v343 = vsub.f32 %v163, %v342
    %344 = vmatpush.msra.mxu0 %v343
    %v345 = vand.u32 %v162, 4294901760
    %v346 = vsub.f32 %v162, %v345
    %347 = vmatpush.msra.mxu0 %v346
    %v348 = vand.u32 %v161, 4294901760
    %v349 = vsub.f32 %v161, %v348
    %350 = vmatpush.msra.mxu0 %v349
    %v351 = vand.u32 %v160, 4294901760
    %v352 = vsub.f32 %v160, %v351
    %353 = vmatpush.msra.mxu0 %v352
    %v354 = vand.u32 %v159, 4294901760
    %v355 = vsub.f32 %v159, %v354
    %356 = vmatpush.msra.mxu0 %v355
    %v357 = vand.u32 %v158, 4294901760
    %v358 = vsub.f32 %v158, %v357
    %359 = vmatpush.msra.mxu0 %v358
    %v360 = vand.u32 %v157, 4294901760
    %v361 = vsub.f32 %v157, %v360
    %362 = vmatpush.msra.mxu0 %v361
    %v363 = vand.u32 %v156, 4294901760
    %v364 = vsub.f32 %v156, %v363
    %365 = vmatpush.msra.mxu0 %v364
    %v366 = vand.u32 %v155, 4294901760
    %v367 = vsub.f32 %v155, %v366
    %368 = vmatpush.msra.mxu0 %v367
    %v369 = vand.u32 %v154, 4294901760
    %v370 = vsub.f32 %v154, %v369
    %371 = vmatpush.msra.mxu0 %v370
    %v372 = vand.u32 %v153, 4294901760
    %v373 = vsub.f32 %v153, %v372
    %374 = vmatpush.msra.mxu0 %v373
    %v375 = vand.u32 %v32, 4294901760
    %v376 = vsub.f32 %v32, %v375
    %377 = vmatmul.f32.gmra.mxu0 %v376
    %v378 = vpop.f32.mrf.mxu0
    %v379 = vadd.f32 %v325, %v378
    %380 = vdwg.mxu0
    %v381 = vand.u32 %v168, 4294901760
    %382 = vmatpush.msra.mxu0 %v381
    %v383 = vand.u32 %v167, 4294901760
    %384 = vmatpush.msra.mxu0 %v383
    %v385 = vand.u32 %v166, 4294901760
    %386 = vmatpush.msra.mxu0 %v385
    %v387 = vand.u32 %v165, 4294901760
    %388 = vmatpush.msra.mxu0 %v387
    %v389 = vand.u32 %v164, 4294901760
    %390 = vmatpush.msra.mxu0 %v389
    %v391 = vand.u32 %v163, 4294901760
    %392 = vmatpush.msra.mxu0 %v391
    %v393 = vand.u32 %v162, 4294901760
    %394 = vmatpush.msra.mxu0 %v393
    %v395 = vand.u32 %v161, 4294901760
    %396 = vmatpush.msra.mxu0 %v395
    %v397 = vand.u32 %v160, 4294901760
    %398 = vmatpush.msra.mxu0 %v397
    %v399 = vand.u32 %v159, 4294901760
    %400 = vmatpush.msra.mxu0 %v399
    %v401 = vand.u32 %v158, 4294901760
    %402 = vmatpush.msra.mxu0 %v401
    %v403 = vand.u32 %v157, 4294901760
    %404 = vmatpush.msra.mxu0 %v403
    %v405 = vand.u32 %v156, 4294901760
    %406 = vmatpush.msra.mxu0 %v405
    %v407 = vand.u32 %v155, 4294901760
    %408 = vmatpush.msra.mxu0 %v407
    %v409 = vand.u32 %v154, 4294901760
    %410 = vmatpush.msra.mxu0 %v409
    %v411 = vand.u32 %v153, 4294901760
    %412 = vmatpush.msra.mxu0 %v411
    %v413 = vand.u32 %v32, 4294901760
    %v414 = vsub.f32 %v32, %v413
    %v415 = vand.u32 %v414, 4294901760
    %416 = vmatmul.f32.gmra.mxu0 %v415
    %v417 = vpop.f32.mrf.mxu0
    %v418 = vadd.f32 %v379, %v417
    %419 = vdwg.mxu0
    %v420 = vand.u32 %v168, 4294901760
    %v421 = vsub.f32 %v168, %v420
    %v422 = vand.u32 %v421, 4294901760
    %423 = vmatpush.msra.mxu0 %v422
    %v424 = vand.u32 %v167, 4294901760
    %v425 = vsub.f32 %v167, %v424
    %v426 = vand.u32 %v425, 4294901760
    %427 = vmatpush.msra.mxu0 %v426
    %v428 = vand.u32 %v166, 4294901760
    %v429 = vsub.f32 %v166, %v428
    %v430 = vand.u32 %v429, 4294901760
    %431 = vmatpush.msra.mxu0 %v430
    %v432 = vand.u32 %v165, 4294901760
    %v433 = vsub.f32 %v165, %v432
    %v434 = vand.u32 %v433, 4294901760
    %435 = vmatpush.msra.mxu0 %v434
    %v436 = vand.u32 %v164, 4294901760
    %v437 = vsub.f32 %v164, %v436
    %v438 = vand.u32 %v437, 4294901760
    %439 = vmatpush.msra.mxu0 %v438
    %v440 = vand.u32 %v163, 4294901760
    %v441 = vsub.f32 %v163, %v440
    %v442 = vand.u32 %v441, 4294901760
    %443 = vmatpush.msra.mxu0 %v442
    %v444 = vand.u32 %v162, 4294901760
    %v445 = vsub.f32 %v162, %v444
    %v446 = vand.u32 %v445, 4294901760
    %447 = vmatpush.msra.mxu0 %v446
    %v448 = vand.u32 %v161, 4294901760
    %v449 = vsub.f32 %v161, %v448
    %v450 = vand.u32 %v449, 4294901760
    %451 = vmatpush.msra.mxu0 %v450
    %v452 = vand.u32 %v160, 4294901760
    %v453 = vsub.f32 %v160, %v452
    %v454 = vand.u32 %v453, 4294901760
    %455 = vmatpush.msra.mxu0 %v454
    %v456 = vand.u32 %v159, 4294901760
    %v457 = vsub.f32 %v159, %v456
    %v458 = vand.u32 %v457, 4294901760
    %459 = vmatpush.msra.mxu0 %v458
    %v460 = vand.u32 %v158, 4294901760
    %v461 = vsub.f32 %v158, %v460
    %v462 = vand.u32 %v461, 4294901760
    %463 = vmatpush.msra.mxu0 %v462
    %v464 = vand.u32 %v157, 4294901760
    %v465 = vsub.f32 %v157, %v464
    %v466 = vand.u32 %v465, 4294901760
    %467 = vmatpush.msra.mxu0 %v466
    %v468 = vand.u32 %v156, 4294901760
    %v469 = vsub.f32 %v156, %v468
    %v470 = vand.u32 %v469, 4294901760
    %471 = vmatpush.msra.mxu0 %v470
    %v472 = vand.u32 %v155, 4294901760
    %v473 = vsub.f32 %v155, %v472
    %v474 = vand.u32 %v473, 4294901760
    %475 = vmatpush.msra.mxu0 %v474
    %v476 = vand.u32 %v154, 4294901760
    %v477 = vsub.f32 %v154, %v476
    %v478 = vand.u32 %v477, 4294901760
    %479 = vmatpush.msra.mxu0 %v478
    %v480 = vand.u32 %v153, 4294901760
    %v481 = vsub.f32 %v153, %v480
    %v482 = vand.u32 %v481, 4294901760
    %483 = vmatpush.msra.mxu0 %v482
    %v484 = vand.u32 %v32, 4294901760
    %485 = vmatmul.f32.gmra.mxu0 %v484
    %v486 = vpop.f32.mrf.mxu0
    %v487 = vadd.f32 %v418, %v486
    %488 = vdwg.mxu0
    %v489 = vand.u32 %v168, 4294901760
    %490 = vmatpush.msra.mxu0 %v489
    %v491 = vand.u32 %v167, 4294901760
    %492 = vmatpush.msra.mxu0 %v491
    %v493 = vand.u32 %v166, 4294901760
    %494 = vmatpush.msra.mxu0 %v493
    %v495 = vand.u32 %v165, 4294901760
    %496 = vmatpush.msra.mxu0 %v495
    %v497 = vand.u32 %v164, 4294901760
    %498 = vmatpush.msra.mxu0 %v497
    %v499 = vand.u32 %v163, 4294901760
    %500 = vmatpush.msra.mxu0 %v499
    %v501 = vand.u32 %v162, 4294901760
    %502 = vmatpush.msra.mxu0 %v501
    %v503 = vand.u32 %v161, 4294901760
    %504 = vmatpush.msra.mxu0 %v503
    %v505 = vand.u32 %v160, 4294901760
    %506 = vmatpush.msra.mxu0 %v505
    %v507 = vand.u32 %v159, 4294901760
    %508 = vmatpush.msra.mxu0 %v507
    %v509 = vand.u32 %v158, 4294901760
    %510 = vmatpush.msra.mxu0 %v509
    %v511 = vand.u32 %v157, 4294901760
    %512 = vmatpush.msra.mxu0 %v511
    %v513 = vand.u32 %v156, 4294901760
    %514 = vmatpush.msra.mxu0 %v513
    %v515 = vand.u32 %v155, 4294901760
    %516 = vmatpush.msra.mxu0 %v515
    %v517 = vand.u32 %v154, 4294901760
    %518 = vmatpush.msra.mxu0 %v517
    %v519 = vand.u32 %v153, 4294901760
    %520 = vmatpush.msra.mxu0 %v519
    %v521 = vand.u32 %v32, 4294901760
    %522 = vmatmul.f32.gmra.mxu0 %v521
    %v523 = vpop.f32.mrf.mxu0
    %v524 = vadd.f32 %v487, %v523
    %525 = vdwg.mxu0
    %v526 = vand.u32 %v184, 4294901760
    %527 = vmatpush.msra.mxu0 %v526
    %v528 = vand.u32 %v183, 4294901760
    %529 = vmatpush.msra.mxu0 %v528
    %v530 = vand.u32 %v182, 4294901760
    %531 = vmatpush.msra.mxu0 %v530
    %v532 = vand.u32 %v181, 4294901760
    %533 = vmatpush.msra.mxu0 %v532
    %v534 = vand.u32 %v180, 4294901760
    %535 = vmatpush.msra.mxu0 %v534
    %v536 = vand.u32 %v179, 4294901760
    %537 = vmatpush.msra.mxu0 %v536
    %v538 = vand.u32 %v178, 4294901760
    %539 = vmatpush.msra.mxu0 %v538
    %v540 = vand.u32 %v177, 4294901760
    %541 = vmatpush.msra.mxu0 %v540
    %v542 = vand.u32 %v176, 4294901760
    %543 = vmatpush.msra.mxu0 %v542
    %v544 = vand.u32 %v175, 4294901760
    %545 = vmatpush.msra.mxu0 %v544
    %v546 = vand.u32 %v174, 4294901760
    %547 = vmatpush.msra.mxu0 %v546
    %v548 = vand.u32 %v173, 4294901760
    %549 = vmatpush.msra.mxu0 %v548
    %v550 = vand.u32 %v172, 4294901760
    %551 = vmatpush.msra.mxu0 %v550
    %v552 = vand.u32 %v171, 4294901760
    %553 = vmatpush.msra.mxu0 %v552
    %v554 = vand.u32 %v170, 4294901760
    %555 = vmatpush.msra.mxu0 %v554
    %v556 = vand.u32 %v169, 4294901760
    %557 = vmatpush.msra.mxu0 %v556
    %v558 = vand.u32 %v33, 4294901760
    %v559 = vsub.f32 %v33, %v558
    %v560 = vand.u32 %v559, 4294901760
    %v561 = vsub.f32 %v559, %v560
    %v562 = vand.u32 %v561, 4294901760
    %563 = vmatmul.f32.gmra.mxu0 %v562
    %v564 = vpop.f32.mrf.mxu0
    %v565 = vadd.f32 %v524, %v564
    %566 = vdwg.mxu0
    %v567 = vand.u32 %v184, 4294901760
    %v568 = vsub.f32 %v184, %v567
    %v569 = vand.u32 %v568, 4294901760
    %v570 = vsub.f32 %v568, %v569
    %v571 = vand.u32 %v570, 4294901760
    %572 = vmatpush.msra.mxu0 %v571
    %v573 = vand.u32 %v183, 4294901760
    %v574 = vsub.f32 %v183, %v573
    %v575 = vand.u32 %v574, 4294901760
    %v576 = vsub.f32 %v574, %v575
    %v577 = vand.u32 %v576, 4294901760
    %578 = vmatpush.msra.mxu0 %v577
    %v579 = vand.u32 %v182, 4294901760
    %v580 = vsub.f32 %v182, %v579
    %v581 = vand.u32 %v580, 4294901760
    %v582 = vsub.f32 %v580, %v581
    %v583 = vand.u32 %v582, 4294901760
    %584 = vmatpush.msra.mxu0 %v583
    %v585 = vand.u32 %v181, 4294901760
    %v586 = vsub.f32 %v181, %v585
    %v587 = vand.u32 %v586, 4294901760
    %v588 = vsub.f32 %v586, %v587
    %v589 = vand.u32 %v588, 4294901760
    %590 = vmatpush.msra.mxu0 %v589
    %v591 = vand.u32 %v180, 4294901760
    %v592 = vsub.f32 %v180, %v591
    %v593 = vand.u32 %v592, 4294901760
    %v594 = vsub.f32 %v592, %v593
    %v595 = vand.u32 %v594, 4294901760
    %596 = vmatpush.msra.mxu0 %v595
    %v597 = vand.u32 %v179, 4294901760
    %v598 = vsub.f32 %v179, %v597
    %v599 = vand.u32 %v598, 4294901760
    %v600 = vsub.f32 %v598, %v599
    %v601 = vand.u32 %v600, 4294901760
    %602 = vmatpush.msra.mxu0 %v601
    %v603 = vand.u32 %v178, 4294901760
    %v604 = vsub.f32 %v178, %v603
    %v605 = vand.u32 %v604, 4294901760
    %v606 = vsub.f32 %v604, %v605
    %v607 = vand.u32 %v606, 4294901760
    %608 = vmatpush.msra.mxu0 %v607
    %v609 = vand.u32 %v177, 4294901760
    %v610 = vsub.f32 %v177, %v609
    %v611 = vand.u32 %v610, 4294901760
    %v612 = vsub.f32 %v610, %v611
    %v613 = vand.u32 %v612, 4294901760
    %614 = vmatpush.msra.mxu0 %v613
    %v615 = vand.u32 %v176, 4294901760
    %v616 = vsub.f32 %v176, %v615
    %v617 = vand.u32 %v616, 4294901760
    %v618 = vsub.f32 %v616, %v617
    %v619 = vand.u32 %v618, 4294901760
    %620 = vmatpush.msra.mxu0 %v619
    %v621 = vand.u32 %v175, 4294901760
    %v622 = vsub.f32 %v175, %v621
    %v623 = vand.u32 %v622, 4294901760
    %v624 = vsub.f32 %v622, %v623
    %v625 = vand.u32 %v624, 4294901760
    %626 = vmatpush.msra.mxu0 %v625
    %v627 = vand.u32 %v174, 4294901760
    %v628 = vsub.f32 %v174, %v627
    %v629 = vand.u32 %v628, 4294901760
    %v630 = vsub.f32 %v628, %v629
    %v631 = vand.u32 %v630, 4294901760
    %632 = vmatpush.msra.mxu0 %v631
    %v633 = vand.u32 %v173, 4294901760
    %v634 = vsub.f32 %v173, %v633
    %v635 = vand.u32 %v634, 4294901760
    %v636 = vsub.f32 %v634, %v635
    %v637 = vand.u32 %v636, 4294901760
    %638 = vmatpush.msra.mxu0 %v637
    %v639 = vand.u32 %v172, 4294901760
    %v640 = vsub.f32 %v172, %v639
    %v641 = vand.u32 %v640, 4294901760
    %v642 = vsub.f32 %v640, %v641
    %v643 = vand.u32 %v642, 4294901760
    %644 = vmatpush.msra.mxu0 %v643
    %v645 = vand.u32 %v171, 4294901760
    %v646 = vsub.f32 %v171, %v645
    %v647 = vand.u32 %v646, 4294901760
    %v648 = vsub.f32 %v646, %v647
    %v649 = vand.u32 %v648, 4294901760
    %650 = vmatpush.msra.mxu0 %v649
    %v651 = vand.u32 %v170, 4294901760
    %v652 = vsub.f32 %v170, %v651
    %v653 = vand.u32 %v652, 4294901760
    %v654 = vsub.f32 %v652, %v653
    %v655 = vand.u32 %v654, 4294901760
    %656 = vmatpush.msra.mxu0 %v655
    %v657 = vand.u32 %v169, 4294901760
    %v658 = vsub.f32 %v169, %v657
    %v659 = vand.u32 %v658, 4294901760
    %v660 = vsub.f32 %v658, %v659
    %v661 = vand.u32 %v660, 4294901760
    %662 = vmatpush.msra.mxu0 %v661
    %v663 = vand.u32 %v33, 4294901760
    %664 = vmatmul.f32.gmra.mxu0 %v663
    %v665 = vpop.f32.mrf.mxu0
    %v666 = vadd.f32 %v565, %v665
    %667 = vdwg.mxu0
    %v668 = vand.u32 %v184, 4294901760
    %v669 = vsub.f32 %v184, %v668
    %670 = vmatpush.msra.mxu0 %v669
    %v671 = vand.u32 %v183, 4294901760
    %v672 = vsub.f32 %v183, %v671
    %673 = vmatpush.msra.mxu0 %v672
    %v674 = vand.u32 %v182, 4294901760
    %v675 = vsub.f32 %v182, %v674
    %676 = vmatpush.msra.mxu0 %v675
    %v677 = vand.u32 %v181, 4294901760
    %v678 = vsub.f32 %v181, %v677
    %679 = vmatpush.msra.mxu0 %v678
    %v680 = vand.u32 %v180, 4294901760
    %v681 = vsub.f32 %v180, %v680
    %682 = vmatpush.msra.mxu0 %v681
    %v683 = vand.u32 %v179, 4294901760
    %v684 = vsub.f32 %v179, %v683
    %685 = vmatpush.msra.mxu0 %v684
    %v686 = vand.u32 %v178, 4294901760
    %v687 = vsub.f32 %v178, %v686
    %688 = vmatpush.msra.mxu0 %v687
    %v689 = vand.u32 %v177, 4294901760
    %v690 = vsub.f32 %v177, %v689
    %691 = vmatpush.msra.mxu0 %v690
    %v692 = vand.u32 %v176, 4294901760
    %v693 = vsub.f32 %v176, %v692
    %694 = vmatpush.msra.mxu0 %v693
    %v695 = vand.u32 %v175, 4294901760
    %v696 = vsub.f32 %v175, %v695
    %697 = vmatpush.msra.mxu0 %v696
    %v698 = vand.u32 %v174, 4294901760
    %v699 = vsub.f32 %v174, %v698
    %700 = vmatpush.msra.mxu0 %v699
    %v701 = vand.u32 %v173, 4294901760
    %v702 = vsub.f32 %v173, %v701
    %703 = vmatpush.msra.mxu0 %v702
    %v704 = vand.u32 %v172, 4294901760
    %v705 = vsub.f32 %v172, %v704
    %706 = vmatpush.msra.mxu0 %v705
    %v707 = vand.u32 %v171, 4294901760
    %v708 = vsub.f32 %v171, %v707
    %709 = vmatpush.msra.mxu0 %v708
    %v710 = vand.u32 %v170, 4294901760
    %v711 = vsub.f32 %v170, %v710
    %712 = vmatpush.msra.mxu0 %v711
    %v713 = vand.u32 %v169, 4294901760
    %v714 = vsub.f32 %v169, %v713
    %715 = vmatpush.msra.mxu0 %v714
    %v716 = vand.u32 %v33, 4294901760
    %v717 = vsub.f32 %v33, %v716
    %718 = vmatmul.f32.gmra.mxu0 %v717
    %v719 = vpop.f32.mrf.mxu0
    %v720 = vadd.f32 %v666, %v719
    %721 = vdwg.mxu0
    %v722 = vand.u32 %v184, 4294901760
    %723 = vmatpush.msra.mxu0 %v722
    %v724 = vand.u32 %v183, 4294901760
    %725 = vmatpush.msra.mxu0 %v724
    %v726 = vand.u32 %v182, 4294901760
    %727 = vmatpush.msra.mxu0 %v726
    %v728 = vand.u32 %v181, 4294901760
    %729 = vmatpush.msra.mxu0 %v728
    %v730 = vand.u32 %v180, 4294901760
    %731 = vmatpush.msra.mxu0 %v730
    %v732 = vand.u32 %v179, 4294901760
    %733 = vmatpush.msra.mxu0 %v732
    %v734 = vand.u32 %v178, 4294901760
    %735 = vmatpush.msra.mxu0 %v734
    %v736 = vand.u32 %v177, 4294901760
    %737 = vmatpush.msra.mxu0 %v736
    %v738 = vand.u32 %v176, 4294901760
    %739 = vmatpush.msra.mxu0 %v738
    %v740 = vand.u32 %v175, 4294901760
    %741 = vmatpush.msra.mxu0 %v740
    %v742 = vand.u32 %v174, 4294901760
    %743 = vmatpush.msra.mxu0 %v742
    %v744 = vand.u32 %v173, 4294901760
    %745 = vmatpush.msra.mxu0 %v744
    %v746 = vand.u32 %v172, 4294901760
    %747 = vmatpush.msra.mxu0 %v746
    %v748 = vand.u32 %v171, 4294901760
    %749 = vmatpush.msra.mxu0 %v748
    %v750 = vand.u32 %v170, 4294901760
    %751 = vmatpush.msra.mxu0 %v750
    %v752 = vand.u32 %v169, 4294901760
    %753 = vmatpush.msra.mxu0 %v752
    %v754 = vand.u32 %v33, 4294901760
    %v755 = vsub.f32 %v33, %v754
    %v756 = vand.u32 %v755, 4294901760
    %757 = vmatmul.f32.gmra.mxu0 %v756
    %v758 = vpop.f32.mrf.mxu0
    %v759 = vadd.f32 %v720, %v758
    %760 = vdwg.mxu0
    %v761 = vand.u32 %v184, 4294901760
    %v762 = vsub.f32 %v184, %v761
    %v763 = vand.u32 %v762, 4294901760
    %764 = vmatpush.msra.mxu0 %v763
    %v765 = vand.u32 %v183, 4294901760
    %v766 = vsub.f32 %v183, %v765
    %v767 = vand.u32 %v766, 4294901760
    %768 = vmatpush.msra.mxu0 %v767
    %v769 = vand.u32 %v182, 4294901760
    %v770 = vsub.f32 %v182, %v769
    %v771 = vand.u32 %v770, 4294901760
    %772 = vmatpush.msra.mxu0 %v771
    %v773 = vand.u32 %v181, 4294901760
    %v774 = vsub.f32 %v181, %v773
    %v775 = vand.u32 %v774, 4294901760
    %776 = vmatpush.msra.mxu0 %v775
    %v777 = vand.u32 %v180, 4294901760
    %v778 = vsub.f32 %v180, %v777
    %v779 = vand.u32 %v778, 4294901760
    %780 = vmatpush.msra.mxu0 %v779
    %v781 = vand.u32 %v179, 4294901760
    %v782 = vsub.f32 %v179, %v781
    %v783 = vand.u32 %v782, 4294901760
    %784 = vmatpush.msra.mxu0 %v783
    %v785 = vand.u32 %v178, 4294901760
    %v786 = vsub.f32 %v178, %v785
    %v787 = vand.u32 %v786, 4294901760
    %788 = vmatpush.msra.mxu0 %v787
    %v789 = vand.u32 %v177, 4294901760
    %v790 = vsub.f32 %v177, %v789
    %v791 = vand.u32 %v790, 4294901760
    %792 = vmatpush.msra.mxu0 %v791
    %v793 = vand.u32 %v176, 4294901760
    %v794 = vsub.f32 %v176, %v793
    %v795 = vand.u32 %v794, 4294901760
    %796 = vmatpush.msra.mxu0 %v795
    %v797 = vand.u32 %v175, 4294901760
    %v798 = vsub.f32 %v175, %v797
    %v799 = vand.u32 %v798, 4294901760
    %800 = vmatpush.msra.mxu0 %v799
    %v801 = vand.u32 %v174, 4294901760
    %v802 = vsub.f32 %v174, %v801
    %v803 = vand.u32 %v802, 4294901760
    %804 = vmatpush.msra.mxu0 %v803
    %v805 = vand.u32 %v173, 4294901760
    %v806 = vsub.f32 %v173, %v805
    %v807 = vand.u32 %v806, 4294901760
    %808 = vmatpush.msra.mxu0 %v807
    %v809 = vand.u32 %v172, 4294901760
    %v810 = vsub.f32 %v172, %v809
    %v811 = vand.u32 %v810, 4294901760
    %812 = vmatpush.msra.mxu0 %v811
    %v813 = vand.u32 %v171, 4294901760
    %v814 = vsub.f32 %v171, %v813
    %v815 = vand.u32 %v814, 4294901760
    %816 = vmatpush.msra.mxu0 %v815
    %v817 = vand.u32 %v170, 4294901760
    %v818 = vsub.f32 %v170, %v817
    %v819 = vand.u32 %v818, 4294901760
    %820 = vmatpush.msra.mxu0 %v819
    %v821 = vand.u32 %v169, 4294901760
    %v822 = vsub.f32 %v169, %v821
    %v823 = vand.u32 %v822, 4294901760
    %824 = vmatpush.msra.mxu0 %v823
    %v825 = vand.u32 %v33, 4294901760
    %826 = vmatmul.f32.gmra.mxu0 %v825
    %v827 = vpop.f32.mrf.mxu0
    %v828 = vadd.f32 %v759, %v827
    %829 = vdwg.mxu0
    %v830 = vand.u32 %v184, 4294901760
    %831 = vmatpush.msra.mxu0 %v830
    %v832 = vand.u32 %v183, 4294901760
    %833 = vmatpush.msra.mxu0 %v832
    %v834 = vand.u32 %v182, 4294901760
    %835 = vmatpush.msra.mxu0 %v834
    %v836 = vand.u32 %v181, 4294901760
    %837 = vmatpush.msra.mxu0 %v836
    %v838 = vand.u32 %v180, 4294901760
    %839 = vmatpush.msra.mxu0 %v838
    %v840 = vand.u32 %v179, 4294901760
    %841 = vmatpush.msra.mxu0 %v840
    %v842 = vand.u32 %v178, 4294901760
    %843 = vmatpush.msra.mxu0 %v842
    %v844 = vand.u32 %v177, 4294901760
    %845 = vmatpush.msra.mxu0 %v844
    %v846 = vand.u32 %v176, 4294901760
    %847 = vmatpush.msra.mxu0 %v846
    %v848 = vand.u32 %v175, 4294901760
    %849 = vmatpush.msra.mxu0 %v848
    %v850 = vand.u32 %v174, 4294901760
    %851 = vmatpush.msra.mxu0 %v850
    %v852 = vand.u32 %v173, 4294901760
    %853 = vmatpush.msra.mxu0 %v852
    %v854 = vand.u32 %v172, 4294901760
    %855 = vmatpush.msra.mxu0 %v854
    %v856 = vand.u32 %v171, 4294901760
    %857 = vmatpush.msra.mxu0 %v856
    %v858 = vand.u32 %v170, 4294901760
    %859 = vmatpush.msra.mxu0 %v858
    %v860 = vand.u32 %v169, 4294901760
    %861 = vmatpush.msra.mxu0 %v860
    %v862 = vand.u32 %v33, 4294901760
    %863 = vmatmul.f32.gmra.mxu0 %v862
    %v864 = vpop.f32.mrf.mxu0
    %v865 = vadd.f32 %v828, %v864
    %866 = vdwg.mxu0
    %v867 = vld [vmem:[%s4] sm:$0xff]
    %v868 = vld [vmem:[%s4 + $0x8] sm:$0xff]
    %v869 = vld [vmem:[%s4 + $0x10] sm:$0xff]
    %v870 = vld [vmem:[%s4 + $0x18] sm:$0xff]
    %v871 = vld [vmem:[%s4 + $0x20] sm:$0xff]
    %v872 = vld [vmem:[%s4 + $0x28] sm:$0xff]
    %v873 = vld [vmem:[%s4 + $0x30] sm:$0xff]
    %v874 = vld [vmem:[%s4 + $0x38] sm:$0xff]
    %v875 = vld [vmem:[%s4 + $0x40] sm:$0xff]
    %v876 = vld [vmem:[%s4 + $0x48] sm:$0xff]
    %v877 = vld [vmem:[%s4 + $0x50] sm:$0xff]
    %v878 = vld [vmem:[%s4 + $0x58] sm:$0xff]
    %v879 = vld [vmem:[%s4 + $0x60] sm:$0xff]
    %v880 = vld [vmem:[%s4 + $0x68] sm:$0xff]
    %v881 = vld [vmem:[%s4 + $0x70] sm:$0xff]
    %v882 = vld [vmem:[%s4 + $0x78] sm:$0xff]
    %v883 = vld [vmem:[%s4 + $0x80] sm:$0xff]
    %v884 = vld [vmem:[%s4 + $0x88] sm:$0xff]
    %v885 = vld [vmem:[%s4 + $0x90] sm:$0xff]
    %v886 = vld [vmem:[%s4 + $0x98] sm:$0xff]
    %v887 = vld [vmem:[%s4 + $0xa0] sm:$0xff]
    %v888 = vld [vmem:[%s4 + $0xa8] sm:$0xff]
    %v889 = vld [vmem:[%s4 + $0xb0] sm:$0xff]
    %v890 = vld [vmem:[%s4 + $0xb8] sm:$0xff]
    %v891 = vld [vmem:[%s4 + $0xc0] sm:$0xff]
    %v892 = vld [vmem:[%s4 + $0xc8] sm:$0xff]
    %v893 = vld [vmem:[%s4 + $0xd0] sm:$0xff]
    %v894 = vld [vmem:[%s4 + $0xd8] sm:$0xff]
    %v895 = vld [vmem:[%s4 + $0xe0] sm:$0xff]
    %v896 = vld [vmem:[%s4 + $0xe8] sm:$0xff]
    %v897 = vld [vmem:[%s4 + $0xf0] sm:$0xff]
    %v898 = vld [vmem:[%s4 + $0xf8] sm:$0xff]
    %v899 = vand.u32 %v882, 4294901760
    %900 = vmatpush.msra.mxu0 %v899
    %v901 = vand.u32 %v881, 4294901760
    %902 = vmatpush.msra.mxu0 %v901
    %v903 = vand.u32 %v880, 4294901760
    %904 = vmatpush.msra.mxu0 %v903
    %v905 = vand.u32 %v879, 4294901760
    %906 = vmatpush.msra.mxu0 %v905
    %v907 = vand.u32 %v878, 4294901760
    %908 = vmatpush.msra.mxu0 %v907
    %v909 = vand.u32 %v877, 4294901760
    %910 = vmatpush.msra.mxu0 %v909
    %v911 = vand.u32 %v876, 4294901760
    %912 = vmatpush.msra.mxu0 %v911
    %v913 = vand.u32 %v875, 4294901760
    %914 = vmatpush.msra.mxu0 %v913
    %v915 = vand.u32 %v874, 4294901760
    %916 = vmatpush.msra.mxu0 %v915
    %v917 = vand.u32 %v873, 4294901760
    %918 = vmatpush.msra.mxu0 %v917
    %v919 = vand.u32 %v872, 4294901760
    %920 = vmatpush.msra.mxu0 %v919
    %v921 = vand.u32 %v871, 4294901760
    %922 = vmatpush.msra.mxu0 %v921
    %v923 = vand.u32 %v870, 4294901760
    %924 = vmatpush.msra.mxu0 %v923
    %v925 = vand.u32 %v869, 4294901760
    %926 = vmatpush.msra.mxu0 %v925
    %v927 = vand.u32 %v868, 4294901760
    %928 = vmatpush.msra.mxu0 %v927
    %v929 = vand.u32 %v867, 4294901760
    %930 = vmatpush.msra.mxu0 %v929
    %v931 = vand.u32 %v42, 4294901760
    %v932 = vsub.f32 %v42, %v931
    %v933 = vand.u32 %v932, 4294901760
    %v934 = vsub.f32 %v932, %v933
    %v935 = vand.u32 %v934, 4294901760
    %936 = vmatmul.f32.gmra.mxu0 %v935
    %v937 = vpop.f32.mrf.mxu0
    %v938 = vadd.f32 0.0, %v937
    %939 = vdwg.mxu0
    %v940 = vand.u32 %v882, 4294901760
    %v941 = vsub.f32 %v882, %v940
    %v942 = vand.u32 %v941, 4294901760
    %v943 = vsub.f32 %v941, %v942
    %v944 = vand.u32 %v943, 4294901760
    %945 = vmatpush.msra.mxu0 %v944
    %v946 = vand.u32 %v881, 4294901760
    %v947 = vsub.f32 %v881, %v946
    %v948 = vand.u32 %v947, 4294901760
    %v949 = vsub.f32 %v947, %v948
    %v950 = vand.u32 %v949, 4294901760
    %951 = vmatpush.msra.mxu0 %v950
    %v952 = vand.u32 %v880, 4294901760
    %v953 = vsub.f32 %v880, %v952
    %v954 = vand.u32 %v953, 4294901760
    %v955 = vsub.f32 %v953, %v954
    %v956 = vand.u32 %v955, 4294901760
    %957 = vmatpush.msra.mxu0 %v956
    %v958 = vand.u32 %v879, 4294901760
    %v959 = vsub.f32 %v879, %v958
    %v960 = vand.u32 %v959, 4294901760
    %v961 = vsub.f32 %v959, %v960
    %v962 = vand.u32 %v961, 4294901760
    %963 = vmatpush.msra.mxu0 %v962
    %v964 = vand.u32 %v878, 4294901760
    %v965 = vsub.f32 %v878, %v964
    %v966 = vand.u32 %v965, 4294901760
    %v967 = vsub.f32 %v965, %v966
    %v968 = vand.u32 %v967, 4294901760
    %969 = vmatpush.msra.mxu0 %v968
    %v970 = vand.u32 %v877, 4294901760
    %v971 = vsub.f32 %v877, %v970
    %v972 = vand.u32 %v971, 4294901760
    %v973 = vsub.f32 %v971, %v972
    %v974 = vand.u32 %v973, 4294901760
    %975 = vmatpush.msra.mxu0 %v974
    %v976 = vand.u32 %v876, 4294901760
    %v977 = vsub.f32 %v876, %v976
    %v978 = vand.u32 %v977, 4294901760
    %v979 = vsub.f32 %v977, %v978
    %v980 = vand.u32 %v979, 4294901760
    %981 = vmatpush.msra.mxu0 %v980
    %v982 = vand.u32 %v875, 4294901760
    %v983 = vsub.f32 %v875, %v982
    %v984 = vand.u32 %v983, 4294901760
    %v985 = vsub.f32 %v983, %v984
    %v986 = vand.u32 %v985, 4294901760
    %987 = vmatpush.msra.mxu0 %v986
    %v988 = vand.u32 %v874, 4294901760
    %v989 = vsub.f32 %v874, %v988
    %v990 = vand.u32 %v989, 4294901760
    %v991 = vsub.f32 %v989, %v990
    %v992 = vand.u32 %v991, 4294901760
    %993 = vmatpush.msra.mxu0 %v992
    %v994 = vand.u32 %v873, 4294901760
    %v995 = vsub.f32 %v873, %v994
    %v996 = vand.u32 %v995, 4294901760
    %v997 = vsub.f32 %v995, %v996
    %v998 = vand.u32 %v997, 4294901760
    %999 = vmatpush.msra.mxu0 %v998
    %v1000 = vand.u32 %v872, 4294901760
    %v1001 = vsub.f32 %v872, %v1000
    %v1002 = vand.u32 %v1001, 4294901760
    %v1003 = vsub.f32 %v1001, %v1002
    %v1004 = vand.u32 %v1003, 4294901760
    %1005 = vmatpush.msra.mxu0 %v1004
    %v1006 = vand.u32 %v871, 4294901760
    %v1007 = vsub.f32 %v871, %v1006
    %v1008 = vand.u32 %v1007, 4294901760
    %v1009 = vsub.f32 %v1007, %v1008
    %v1010 = vand.u32 %v1009, 4294901760
    %1011 = vmatpush.msra.mxu0 %v1010
    %v1012 = vand.u32 %v870, 4294901760
    %v1013 = vsub.f32 %v870, %v1012
    %v1014 = vand.u32 %v1013, 4294901760
    %v1015 = vsub.f32 %v1013, %v1014
    %v1016 = vand.u32 %v1015, 4294901760
    %1017 = vmatpush.msra.mxu0 %v1016
    %v1018 = vand.u32 %v869, 4294901760
    %v1019 = vsub.f32 %v869, %v1018
    %v1020 = vand.u32 %v1019, 4294901760
    %v1021 = vsub.f32 %v1019, %v1020
    %v1022 = vand.u32 %v1021, 4294901760
    %1023 = vmatpush.msra.mxu0 %v1022
    %v1024 = vand.u32 %v868, 4294901760
    %v1025 = vsub.f32 %v868, %v1024
    %v1026 = vand.u32 %v1025, 4294901760
    %v1027 = vsub.f32 %v1025, %v1026
    %v1028 = vand.u32 %v1027, 4294901760
    %1029 = vmatpush.msra.mxu0 %v1028
    %v1030 = vand.u32 %v867, 4294901760
    %v1031 = vsub.f32 %v867, %v1030
    %v1032 = vand.u32 %v1031, 4294901760
    %v1033 = vsub.f32 %v1031, %v1032
    %v1034 = vand.u32 %v1033, 4294901760
    %1035 = vmatpush.msra.mxu0 %v1034
    %v1036 = vand.u32 %v42, 4294901760
    %1037 = vmatmul.f32.gmra.mxu0 %v1036
    %v1038 = vpop.f32.mrf.mxu0
    %v1039 = vadd.f32 %v938, %v1038
    %1040 = vdwg.mxu0
    %v1041 = vand.u32 %v882, 4294901760
    %v1042 = vsub.f32 %v882, %v1041
    %1043 = vmatpush.msra.mxu0 %v1042
    %v1044 = vand.u32 %v881, 4294901760
    %v1045 = vsub.f32 %v881, %v1044
    %1046 = vmatpush.msra.mxu0 %v1045
    %v1047 = vand.u32 %v880, 4294901760
    %v1048 = vsub.f32 %v880, %v1047
    %1049 = vmatpush.msra.mxu0 %v1048
    %v1050 = vand.u32 %v879, 4294901760
    %v1051 = vsub.f32 %v879, %v1050
    %1052 = vmatpush.msra.mxu0 %v1051
    %v1053 = vand.u32 %v878, 4294901760
    %v1054 = vsub.f32 %v878, %v1053
    %1055 = vmatpush.msra.mxu0 %v1054
    %v1056 = vand.u32 %v877, 4294901760
    %v1057 = vsub.f32 %v877, %v1056
    %1058 = vmatpush.msra.mxu0 %v1057
    %v1059 = vand.u32 %v876, 4294901760
    %v1060 = vsub.f32 %v876, %v1059
    %1061 = vmatpush.msra.mxu0 %v1060
    %v1062 = vand.u32 %v875, 4294901760
    %v1063 = vsub.f32 %v875, %v1062
    %1064 = vmatpush.msra.mxu0 %v1063
    %v1065 = vand.u32 %v874, 4294901760
    %v1066 = vsub.f32 %v874, %v1065
    %1067 = vmatpush.msra.mxu0 %v1066
    %v1068 = vand.u32 %v873, 4294901760
    %v1069 = vsub.f32 %v873, %v1068
    %1070 = vmatpush.msra.mxu0 %v1069
    %v1071 = vand.u32 %v872, 4294901760
    %v1072 = vsub.f32 %v872, %v1071
    %1073 = vmatpush.msra.mxu0 %v1072
    %v1074 = vand.u32 %v871, 4294901760
    %v1075 = vsub.f32 %v871, %v1074
    %1076 = vmatpush.msra.mxu0 %v1075
    %v1077 = vand.u32 %v870, 4294901760
    %v1078 = vsub.f32 %v870, %v1077
    %1079 = vmatpush.msra.mxu0 %v1078
    %v1080 = vand.u32 %v869, 4294901760
    %v1081 = vsub.f32 %v869, %v1080
    %1082 = vmatpush.msra.mxu0 %v1081
    %v1083 = vand.u32 %v868, 4294901760
    %v1084 = vsub.f32 %v868, %v1083
    %1085 = vmatpush.msra.mxu0 %v1084
    %v1086 = vand.u32 %v867, 4294901760
    %v1087 = vsub.f32 %v867, %v1086
    %1088 = vmatpush.msra.mxu0 %v1087
    %v1089 = vand.u32 %v42, 4294901760
    %v1090 = vsub.f32 %v42, %v1089
    %1091 = vmatmul.f32.gmra.mxu0 %v1090
    %v1092 = vpop.f32.mrf.mxu0
    %v1093 = vadd.f32 %v1039, %v1092
    %1094 = vdwg.mxu0
    %v1095 = vand.u32 %v882, 4294901760
    %1096 = vmatpush.msra.mxu0 %v1095
    %v1097 = vand.u32 %v881, 4294901760
    %1098 = vmatpush.msra.mxu0 %v1097
    %v1099 = vand.u32 %v880, 4294901760
    %1100 = vmatpush.msra.mxu0 %v1099
    %v1101 = vand.u32 %v879, 4294901760
    %1102 = vmatpush.msra.mxu0 %v1101
    %v1103 = vand.u32 %v878, 4294901760
    %1104 = vmatpush.msra.mxu0 %v1103
    %v1105 = vand.u32 %v877, 4294901760
    %1106 = vmatpush.msra.mxu0 %v1105
    %v1107 = vand.u32 %v876, 4294901760
    %1108 = vmatpush.msra.mxu0 %v1107
    %v1109 = vand.u32 %v875, 4294901760
    %1110 = vmatpush.msra.mxu0 %v1109
    %v1111 = vand.u32 %v874, 4294901760
    %1112 = vmatpush.msra.mxu0 %v1111
    %v1113 = vand.u32 %v873, 4294901760
    %1114 = vmatpush.msra.mxu0 %v1113
    %v1115 = vand.u32 %v872, 4294901760
    %1116 = vmatpush.msra.mxu0 %v1115
    %v1117 = vand.u32 %v871, 4294901760
    %1118 = vmatpush.msra.mxu0 %v1117
    %v1119 = vand.u32 %v870, 4294901760
    %1120 = vmatpush.msra.mxu0 %v1119
    %v1121 = vand.u32 %v869, 4294901760
    %1122 = vmatpush.msra.mxu0 %v1121
    %v1123 = vand.u32 %v868, 4294901760
    %1124 = vmatpush.msra.mxu0 %v1123
    %v1125 = vand.u32 %v867, 4294901760
    %1126 = vmatpush.msra.mxu0 %v1125
    %v1127 = vand.u32 %v42, 4294901760
    %v1128 = vsub.f32 %v42, %v1127
    %v1129 = vand.u32 %v1128, 4294901760
    %1130 = vmatmul.f32.gmra.mxu0 %v1129
    %v1131 = vpop.f32.mrf.mxu0
    %v1132 = vadd.f32 %v1093, %v1131
    %1133 = vdwg.mxu0
    %v1134 = vand.u32 %v882, 4294901760
    %v1135 = vsub.f32 %v882, %v1134
    %v1136 = vand.u32 %v1135, 4294901760
    %1137 = vmatpush.msra.mxu0 %v1136
    %v1138 = vand.u32 %v881, 4294901760
    %v1139 = vsub.f32 %v881, %v1138
    %v1140 = vand.u32 %v1139, 4294901760
    %1141 = vmatpush.msra.mxu0 %v1140
    %v1142 = vand.u32 %v880, 4294901760
    %v1143 = vsub.f32 %v880, %v1142
    %v1144 = vand.u32 %v1143, 4294901760
    %1145 = vmatpush.msra.mxu0 %v1144
    %v1146 = vand.u32 %v879, 4294901760
    %v1147 = vsub.f32 %v879, %v1146
    %v1148 = vand.u32 %v1147, 4294901760
    %1149 = vmatpush.msra.mxu0 %v1148
    %v1150 = vand.u32 %v878, 4294901760
    %v1151 = vsub.f32 %v878, %v1150
    %v1152 = vand.u32 %v1151, 4294901760
    %1153 = vmatpush.msra.mxu0 %v1152
    %v1154 = vand.u32 %v877, 4294901760
    %v1155 = vsub.f32 %v877, %v1154
    %v1156 = vand.u32 %v1155, 4294901760
    %1157 = vmatpush.msra.mxu0 %v1156
    %v1158 = vand.u32 %v876, 4294901760
    %v1159 = vsub.f32 %v876, %v1158
    %v1160 = vand.u32 %v1159, 4294901760
    %1161 = vmatpush.msra.mxu0 %v1160
    %v1162 = vand.u32 %v875, 4294901760
    %v1163 = vsub.f32 %v875, %v1162
    %v1164 = vand.u32 %v1163, 4294901760
    %1165 = vmatpush.msra.mxu0 %v1164
    %v1166 = vand.u32 %v874, 4294901760
    %v1167 = vsub.f32 %v874, %v1166
    %v1168 = vand.u32 %v1167, 4294901760
    %1169 = vmatpush.msra.mxu0 %v1168
    %v1170 = vand.u32 %v873, 4294901760
    %v1171 = vsub.f32 %v873, %v1170
    %v1172 = vand.u32 %v1171, 4294901760
    %1173 = vmatpush.msra.mxu0 %v1172
    %v1174 = vand.u32 %v872, 4294901760
    %v1175 = vsub.f32 %v872, %v1174
    %v1176 = vand.u32 %v1175, 4294901760
    %1177 = vmatpush.msra.mxu0 %v1176
    %v1178 = vand.u32 %v871, 4294901760
    %v1179 = vsub.f32 %v871, %v1178
    %v1180 = vand.u32 %v1179, 4294901760
    %1181 = vmatpush.msra.mxu0 %v1180
    %v1182 = vand.u32 %v870, 4294901760
    %v1183 = vsub.f32 %v870, %v1182
    %v1184 = vand.u32 %v1183, 4294901760
    %1185 = vmatpush.msra.mxu0 %v1184
    %v1186 = vand.u32 %v869, 4294901760
    %v1187 = vsub.f32 %v869, %v1186
    %v1188 = vand.u32 %v1187, 4294901760
    %1189 = vmatpush.msra.mxu0 %v1188
    %v1190 = vand.u32 %v868, 4294901760
    %v1191 = vsub.f32 %v868, %v1190
    %v1192 = vand.u32 %v1191, 4294901760
    %1193 = vmatpush.msra.mxu0 %v1192
    %v1194 = vand.u32 %v867, 4294901760
    %v1195 = vsub.f32 %v867, %v1194
    %v1196 = vand.u32 %v1195, 4294901760
    %1197 = vmatpush.msra.mxu0 %v1196
    %v1198 = vand.u32 %v42, 4294901760
    %1199 = vmatmul.f32.gmra.mxu0 %v1198
    %v1200 = vpop.f32.mrf.mxu0
    %v1201 = vadd.f32 %v1132, %v1200
    %1202 = vdwg.mxu0
    %v1203 = vand.u32 %v882, 4294901760
    %1204 = vmatpush.msra.mxu0 %v1203
    %v1205 = vand.u32 %v881, 4294901760
    %1206 = vmatpush.msra.mxu0 %v1205
    %v1207 = vand.u32 %v880, 4294901760
    %1208 = vmatpush.msra.mxu0 %v1207
    %v1209 = vand.u32 %v879, 4294901760
    %1210 = vmatpush.msra.mxu0 %v1209
    %v1211 = vand.u32 %v878, 4294901760
    %1212 = vmatpush.msra.mxu0 %v1211
    %v1213 = vand.u32 %v877, 4294901760
    %1214 = vmatpush.msra.mxu0 %v1213
    %v1215 = vand.u32 %v876, 4294901760
    %1216 = vmatpush.msra.mxu0 %v1215
    %v1217 = vand.u32 %v875, 4294901760
    %1218 = vmatpush.msra.mxu0 %v1217
    %v1219 = vand.u32 %v874, 4294901760
    %1220 = vmatpush.msra.mxu0 %v1219
    %v1221 = vand.u32 %v873, 4294901760
    %1222 = vmatpush.msra.mxu0 %v1221
    %v1223 = vand.u32 %v872, 4294901760
    %1224 = vmatpush.msra.mxu0 %v1223
    %v1225 = vand.u32 %v871, 4294901760
    %1226 = vmatpush.msra.mxu0 %v1225
    %v1227 = vand.u32 %v870, 4294901760
    %1228 = vmatpush.msra.mxu0 %v1227
    %v1229 = vand.u32 %v869, 4294901760
    %1230 = vmatpush.msra.mxu0 %v1229
    %v1231 = vand.u32 %v868, 4294901760
    %1232 = vmatpush.msra.mxu0 %v1231
    %v1233 = vand.u32 %v867, 4294901760
    %1234 = vmatpush.msra.mxu0 %v1233
    %v1235 = vand.u32 %v42, 4294901760
    %1236 = vmatmul.f32.gmra.mxu0 %v1235
    %v1237 = vpop.f32.mrf.mxu0
    %v1238 = vadd.f32 %v1201, %v1237
    %1239 = vdwg.mxu0
    %v1240 = vand.u32 %v898, 4294901760
    %1241 = vmatpush.msra.mxu0 %v1240
    %v1242 = vand.u32 %v897, 4294901760
    %1243 = vmatpush.msra.mxu0 %v1242
    %v1244 = vand.u32 %v896, 4294901760
    %1245 = vmatpush.msra.mxu0 %v1244
    %v1246 = vand.u32 %v895, 4294901760
    %1247 = vmatpush.msra.mxu0 %v1246
    %v1248 = vand.u32 %v894, 4294901760
    %1249 = vmatpush.msra.mxu0 %v1248
    %v1250 = vand.u32 %v893, 4294901760
    %1251 = vmatpush.msra.mxu0 %v1250
    %v1252 = vand.u32 %v892, 4294901760
    %1253 = vmatpush.msra.mxu0 %v1252
    %v1254 = vand.u32 %v891, 4294901760
    %1255 = vmatpush.msra.mxu0 %v1254
    %v1256 = vand.u32 %v890, 4294901760
    %1257 = vmatpush.msra.mxu0 %v1256
    %v1258 = vand.u32 %v889, 4294901760
    %1259 = vmatpush.msra.mxu0 %v1258
    %v1260 = vand.u32 %v888, 4294901760
    %1261 = vmatpush.msra.mxu0 %v1260
    %v1262 = vand.u32 %v887, 4294901760
    %1263 = vmatpush.msra.mxu0 %v1262
    %v1264 = vand.u32 %v886, 4294901760
    %1265 = vmatpush.msra.mxu0 %v1264
    %v1266 = vand.u32 %v885, 4294901760
    %1267 = vmatpush.msra.mxu0 %v1266
    %v1268 = vand.u32 %v884, 4294901760
    %1269 = vmatpush.msra.mxu0 %v1268
    %v1270 = vand.u32 %v883, 4294901760
    %1271 = vmatpush.msra.mxu0 %v1270
    %v1272 = vand.u32 %v43, 4294901760
    %v1273 = vsub.f32 %v43, %v1272
    %v1274 = vand.u32 %v1273, 4294901760
    %v1275 = vsub.f32 %v1273, %v1274
    %v1276 = vand.u32 %v1275, 4294901760
    %1277 = vmatmul.f32.gmra.mxu0 %v1276
    %v1278 = vpop.f32.mrf.mxu0
    %v1279 = vadd.f32 %v1238, %v1278
    %1280 = vdwg.mxu0
    %v1281 = vand.u32 %v898, 4294901760
    %v1282 = vsub.f32 %v898, %v1281
    %v1283 = vand.u32 %v1282, 4294901760
    %v1284 = vsub.f32 %v1282, %v1283
    %v1285 = vand.u32 %v1284, 4294901760
    %1286 = vmatpush.msra.mxu0 %v1285
    %v1287 = vand.u32 %v897, 4294901760
    %v1288 = vsub.f32 %v897, %v1287
    %v1289 = vand.u32 %v1288, 4294901760
    %v1290 = vsub.f32 %v1288, %v1289
    %v1291 = vand.u32 %v1290, 4294901760
    %1292 = vmatpush.msra.mxu0 %v1291
    %v1293 = vand.u32 %v896, 4294901760
    %v1294 = vsub.f32 %v896, %v1293
    %v1295 = vand.u32 %v1294, 4294901760
    %v1296 = vsub.f32 %v1294, %v1295
    %v1297 = vand.u32 %v1296, 4294901760
    %1298 = vmatpush.msra.mxu0 %v1297
    %v1299 = vand.u32 %v895, 4294901760
    %v1300 = vsub.f32 %v895, %v1299
    %v1301 = vand.u32 %v1300, 4294901760
    %v1302 = vsub.f32 %v1300, %v1301
    %v1303 = vand.u32 %v1302, 4294901760
    %1304 = vmatpush.msra.mxu0 %v1303
    %v1305 = vand.u32 %v894, 4294901760
    %v1306 = vsub.f32 %v894, %v1305
    %v1307 = vand.u32 %v1306, 4294901760
    %v1308 = vsub.f32 %v1306, %v1307
    %v1309 = vand.u32 %v1308, 4294901760
    %1310 = vmatpush.msra.mxu0 %v1309
    %v1311 = vand.u32 %v893, 4294901760
    %v1312 = vsub.f32 %v893, %v1311
    %v1313 = vand.u32 %v1312, 4294901760
    %v1314 = vsub.f32 %v1312, %v1313
    %v1315 = vand.u32 %v1314, 4294901760
    %1316 = vmatpush.msra.mxu0 %v1315
    %v1317 = vand.u32 %v892, 4294901760
    %v1318 = vsub.f32 %v892, %v1317
    %v1319 = vand.u32 %v1318, 4294901760
    %v1320 = vsub.f32 %v1318, %v1319
    %v1321 = vand.u32 %v1320, 4294901760
    %1322 = vmatpush.msra.mxu0 %v1321
    %v1323 = vand.u32 %v891, 4294901760
    %v1324 = vsub.f32 %v891, %v1323
    %v1325 = vand.u32 %v1324, 4294901760
    %v1326 = vsub.f32 %v1324, %v1325
    %v1327 = vand.u32 %v1326, 4294901760
    %1328 = vmatpush.msra.mxu0 %v1327
    %v1329 = vand.u32 %v890, 4294901760
    %v1330 = vsub.f32 %v890, %v1329
    %v1331 = vand.u32 %v1330, 4294901760
    %v1332 = vsub.f32 %v1330, %v1331
    %v1333 = vand.u32 %v1332, 4294901760
    %1334 = vmatpush.msra.mxu0 %v1333
    %v1335 = vand.u32 %v889, 4294901760
    %v1336 = vsub.f32 %v889, %v1335
    %v1337 = vand.u32 %v1336, 4294901760
    %v1338 = vsub.f32 %v1336, %v1337
    %v1339 = vand.u32 %v1338, 4294901760
    %1340 = vmatpush.msra.mxu0 %v1339
    %v1341 = vand.u32 %v888, 4294901760
    %v1342 = vsub.f32 %v888, %v1341
    %v1343 = vand.u32 %v1342, 4294901760
    %v1344 = vsub.f32 %v1342, %v1343
    %v1345 = vand.u32 %v1344, 4294901760
    %1346 = vmatpush.msra.mxu0 %v1345
    %v1347 = vand.u32 %v887, 4294901760
    %v1348 = vsub.f32 %v887, %v1347
    %v1349 = vand.u32 %v1348, 4294901760
    %v1350 = vsub.f32 %v1348, %v1349
    %v1351 = vand.u32 %v1350, 4294901760
    %1352 = vmatpush.msra.mxu0 %v1351
    %v1353 = vand.u32 %v886, 4294901760
    %v1354 = vsub.f32 %v886, %v1353
    %v1355 = vand.u32 %v1354, 4294901760
    %v1356 = vsub.f32 %v1354, %v1355
    %v1357 = vand.u32 %v1356, 4294901760
    %1358 = vmatpush.msra.mxu0 %v1357
    %v1359 = vand.u32 %v885, 4294901760
    %v1360 = vsub.f32 %v885, %v1359
    %v1361 = vand.u32 %v1360, 4294901760
    %v1362 = vsub.f32 %v1360, %v1361
    %v1363 = vand.u32 %v1362, 4294901760
    %1364 = vmatpush.msra.mxu0 %v1363
    %v1365 = vand.u32 %v884, 4294901760
    %v1366 = vsub.f32 %v884, %v1365
    %v1367 = vand.u32 %v1366, 4294901760
    %v1368 = vsub.f32 %v1366, %v1367
    %v1369 = vand.u32 %v1368, 4294901760
    %1370 = vmatpush.msra.mxu0 %v1369
    %v1371 = vand.u32 %v883, 4294901760
    %v1372 = vsub.f32 %v883, %v1371
    %v1373 = vand.u32 %v1372, 4294901760
    %v1374 = vsub.f32 %v1372, %v1373
    %v1375 = vand.u32 %v1374, 4294901760
    %1376 = vmatpush.msra.mxu0 %v1375
    %v1377 = vand.u32 %v43, 4294901760
    %1378 = vmatmul.f32.gmra.mxu0 %v1377
    %v1379 = vpop.f32.mrf.mxu0
    %v1380 = vadd.f32 %v1279, %v1379
    %1381 = vdwg.mxu0
    %v1382 = vand.u32 %v898, 4294901760
    %v1383 = vsub.f32 %v898, %v1382
    %1384 = vmatpush.msra.mxu0 %v1383
    %v1385 = vand.u32 %v897, 4294901760
    %v1386 = vsub.f32 %v897, %v1385
    %1387 = vmatpush.msra.mxu0 %v1386
    %v1388 = vand.u32 %v896, 4294901760
    %v1389 = vsub.f32 %v896, %v1388
    %1390 = vmatpush.msra.mxu0 %v1389
    %v1391 = vand.u32 %v895, 4294901760
    %v1392 = vsub.f32 %v895, %v1391
    %1393 = vmatpush.msra.mxu0 %v1392
    %v1394 = vand.u32 %v894, 4294901760
    %v1395 = vsub.f32 %v894, %v1394
    %1396 = vmatpush.msra.mxu0 %v1395
    %v1397 = vand.u32 %v893, 4294901760
    %v1398 = vsub.f32 %v893, %v1397
    %1399 = vmatpush.msra.mxu0 %v1398
    %v1400 = vand.u32 %v892, 4294901760
    %v1401 = vsub.f32 %v892, %v1400
    %1402 = vmatpush.msra.mxu0 %v1401
    %v1403 = vand.u32 %v891, 4294901760
    %v1404 = vsub.f32 %v891, %v1403
    %1405 = vmatpush.msra.mxu0 %v1404
    %v1406 = vand.u32 %v890, 4294901760
    %v1407 = vsub.f32 %v890, %v1406
    %1408 = vmatpush.msra.mxu0 %v1407
    %v1409 = vand.u32 %v889, 4294901760
    %v1410 = vsub.f32 %v889, %v1409
    %1411 = vmatpush.msra.mxu0 %v1410
    %v1412 = vand.u32 %v888, 4294901760
    %v1413 = vsub.f32 %v888, %v1412
    %1414 = vmatpush.msra.mxu0 %v1413
    %v1415 = vand.u32 %v887, 4294901760
    %v1416 = vsub.f32 %v887, %v1415
    %1417 = vmatpush.msra.mxu0 %v1416
    %v1418 = vand.u32 %v886, 4294901760
    %v1419 = vsub.f32 %v886, %v1418
    %1420 = vmatpush.msra.mxu0 %v1419
    %v1421 = vand.u32 %v885, 4294901760
    %v1422 = vsub.f32 %v885, %v1421
    %1423 = vmatpush.msra.mxu0 %v1422
    %v1424 = vand.u32 %v884, 4294901760
    %v1425 = vsub.f32 %v884, %v1424
    %1426 = vmatpush.msra.mxu0 %v1425
    %v1427 = vand.u32 %v883, 4294901760
    %v1428 = vsub.f32 %v883, %v1427
    %1429 = vmatpush.msra.mxu0 %v1428
    %v1430 = vand.u32 %v43, 4294901760
    %v1431 = vsub.f32 %v43, %v1430
    %1432 = vmatmul.f32.gmra.mxu0 %v1431
    %v1433 = vpop.f32.mrf.mxu0
    %v1434 = vadd.f32 %v1380, %v1433
    %1435 = vdwg.mxu0
    %v1436 = vand.u32 %v898, 4294901760
    %1437 = vmatpush.msra.mxu0 %v1436
    %v1438 = vand.u32 %v897, 4294901760
    %1439 = vmatpush.msra.mxu0 %v1438
    %v1440 = vand.u32 %v896, 4294901760
    %1441 = vmatpush.msra.mxu0 %v1440
    %v1442 = vand.u32 %v895, 4294901760
    %1443 = vmatpush.msra.mxu0 %v1442
    %v1444 = vand.u32 %v894, 4294901760
    %1445 = vmatpush.msra.mxu0 %v1444
    %v1446 = vand.u32 %v893, 4294901760
    %1447 = vmatpush.msra.mxu0 %v1446
    %v1448 = vand.u32 %v892, 4294901760
    %1449 = vmatpush.msra.mxu0 %v1448
    %v1450 = vand.u32 %v891, 4294901760
    %1451 = vmatpush.msra.mxu0 %v1450
    %v1452 = vand.u32 %v890, 4294901760
    %1453 = vmatpush.msra.mxu0 %v1452
    %v1454 = vand.u32 %v889, 4294901760
    %1455 = vmatpush.msra.mxu0 %v1454
    %v1456 = vand.u32 %v888, 4294901760
    %1457 = vmatpush.msra.mxu0 %v1456
    %v1458 = vand.u32 %v887, 4294901760
    %1459 = vmatpush.msra.mxu0 %v1458
    %v1460 = vand.u32 %v886, 4294901760
    %1461 = vmatpush.msra.mxu0 %v1460
    %v1462 = vand.u32 %v885, 4294901760
    %1463 = vmatpush.msra.mxu0 %v1462
    %v1464 = vand.u32 %v884, 4294901760
    %1465 = vmatpush.msra.mxu0 %v1464
    %v1466 = vand.u32 %v883, 4294901760
    %1467 = vmatpush.msra.mxu0 %v1466
    %v1468 = vand.u32 %v43, 4294901760
    %v1469 = vsub.f32 %v43, %v1468
    %v1470 = vand.u32 %v1469, 4294901760
    %1471 = vmatmul.f32.gmra.mxu0 %v1470
    %v1472 = vpop.f32.mrf.mxu0
    %v1473 = vadd.f32 %v1434, %v1472
    %1474 = vdwg.mxu0
    %v1475 = vand.u32 %v898, 4294901760
    %v1476 = vsub.f32 %v898, %v1475
    %v1477 = vand.u32 %v1476, 4294901760
    %1478 = vmatpush.msra.mxu0 %v1477
    %v1479 = vand.u32 %v897, 4294901760
    %v1480 = vsub.f32 %v897, %v1479
    %v1481 = vand.u32 %v1480, 4294901760
    %1482 = vmatpush.msra.mxu0 %v1481
    %v1483 = vand.u32 %v896, 4294901760
    %v1484 = vsub.f32 %v896, %v1483
    %v1485 = vand.u32 %v1484, 4294901760
    %1486 = vmatpush.msra.mxu0 %v1485
    %v1487 = vand.u32 %v895, 4294901760
    %v1488 = vsub.f32 %v895, %v1487
    %v1489 = vand.u32 %v1488, 4294901760
    %1490 = vmatpush.msra.mxu0 %v1489
    %v1491 = vand.u32 %v894, 4294901760
    %v1492 = vsub.f32 %v894, %v1491
    %v1493 = vand.u32 %v1492, 4294901760
    %1494 = vmatpush.msra.mxu0 %v1493
    %v1495 = vand.u32 %v893, 4294901760
    %v1496 = vsub.f32 %v893, %v1495
    %v1497 = vand.u32 %v1496, 4294901760
    %1498 = vmatpush.msra.mxu0 %v1497
    %v1499 = vand.u32 %v892, 4294901760
    %v1500 = vsub.f32 %v892, %v1499
    %v1501 = vand.u32 %v1500, 4294901760
    %1502 = vmatpush.msra.mxu0 %v1501
    %v1503 = vand.u32 %v891, 4294901760
    %v1504 = vsub.f32 %v891, %v1503
    %v1505 = vand.u32 %v1504, 4294901760
    %1506 = vmatpush.msra.mxu0 %v1505
    %v1507 = vand.u32 %v890, 4294901760
    %v1508 = vsub.f32 %v890, %v1507
    %v1509 = vand.u32 %v1508, 4294901760
    %1510 = vmatpush.msra.mxu0 %v1509
    %v1511 = vand.u32 %v889, 4294901760
    %v1512 = vsub.f32 %v889, %v1511
    %v1513 = vand.u32 %v1512, 4294901760
    %1514 = vmatpush.msra.mxu0 %v1513
    %v1515 = vand.u32 %v888, 4294901760
    %v1516 = vsub.f32 %v888, %v1515
    %v1517 = vand.u32 %v1516, 4294901760
    %1518 = vmatpush.msra.mxu0 %v1517
    %v1519 = vand.u32 %v887, 4294901760
    %v1520 = vsub.f32 %v887, %v1519
    %v1521 = vand.u32 %v1520, 4294901760
    %1522 = vmatpush.msra.mxu0 %v1521
    %v1523 = vand.u32 %v886, 4294901760
    %v1524 = vsub.f32 %v886, %v1523
    %v1525 = vand.u32 %v1524, 4294901760
    %1526 = vmatpush.msra.mxu0 %v1525
    %v1527 = vand.u32 %v885, 4294901760
    %v1528 = vsub.f32 %v885, %v1527
    %v1529 = vand.u32 %v1528, 4294901760
    %1530 = vmatpush.msra.mxu0 %v1529
    %v1531 = vand.u32 %v884, 4294901760
    %v1532 = vsub.f32 %v884, %v1531
    %v1533 = vand.u32 %v1532, 4294901760
    %1534 = vmatpush.msra.mxu0 %v1533
    %v1535 = vand.u32 %v883, 4294901760
    %v1536 = vsub.f32 %v883, %v1535
    %v1537 = vand.u32 %v1536, 4294901760
    %1538 = vmatpush.msra.mxu0 %v1537
    %v1539 = vand.u32 %v43, 4294901760
    %1540 = vmatmul.f32.gmra.mxu0 %v1539
    %v1541 = vpop.f32.mrf.mxu0
    %v1542 = vadd.f32 %v1473, %v1541
    %1543 = vdwg.mxu0
    %v1544 = vand.u32 %v898, 4294901760
    %1545 = vmatpush.msra.mxu0 %v1544
    %v1546 = vand.u32 %v897, 4294901760
    %1547 = vmatpush.msra.mxu0 %v1546
    %v1548 = vand.u32 %v896, 4294901760
    %1549 = vmatpush.msra.mxu0 %v1548
    %v1550 = vand.u32 %v895, 4294901760
    %1551 = vmatpush.msra.mxu0 %v1550
    %v1552 = vand.u32 %v894, 4294901760
    %1553 = vmatpush.msra.mxu0 %v1552
    %v1554 = vand.u32 %v893, 4294901760
    %1555 = vmatpush.msra.mxu0 %v1554
    %v1556 = vand.u32 %v892, 4294901760
    %1557 = vmatpush.msra.mxu0 %v1556
    %v1558 = vand.u32 %v891, 4294901760
    %1559 = vmatpush.msra.mxu0 %v1558
    %v1560 = vand.u32 %v890, 4294901760
    %1561 = vmatpush.msra.mxu0 %v1560
    %v1562 = vand.u32 %v889, 4294901760
    %1563 = vmatpush.msra.mxu0 %v1562
    %v1564 = vand.u32 %v888, 4294901760
    %1565 = vmatpush.msra.mxu0 %v1564
    %v1566 = vand.u32 %v887, 4294901760
    %1567 = vmatpush.msra.mxu0 %v1566
    %v1568 = vand.u32 %v886, 4294901760
    %1569 = vmatpush.msra.mxu0 %v1568
    %v1570 = vand.u32 %v885, 4294901760
    %1571 = vmatpush.msra.mxu0 %v1570
    %v1572 = vand.u32 %v884, 4294901760
    %1573 = vmatpush.msra.mxu0 %v1572
    %v1574 = vand.u32 %v883, 4294901760
    %1575 = vmatpush.msra.mxu0 %v1574
    %v1576 = vand.u32 %v43, 4294901760
    %1577 = vmatmul.f32.gmra.mxu0 %v1576
    %v1578 = vpop.f32.mrf.mxu0
    %v1579 = vadd.f32 %v1542, %v1578
    %1580 = vdwg.mxu0
    %v1581 = vand.u32 %v882, 4294901760
    %1582 = vmatpush.msra.mxu0 %v1581
    %v1583 = vand.u32 %v881, 4294901760
    %1584 = vmatpush.msra.mxu0 %v1583
    %v1585 = vand.u32 %v880, 4294901760
    %1586 = vmatpush.msra.mxu0 %v1585
    %v1587 = vand.u32 %v879, 4294901760
    %1588 = vmatpush.msra.mxu0 %v1587
    %v1589 = vand.u32 %v878, 4294901760
    %1590 = vmatpush.msra.mxu0 %v1589
    %v1591 = vand.u32 %v877, 4294901760
    %1592 = vmatpush.msra.mxu0 %v1591
    %v1593 = vand.u32 %v876, 4294901760
    %1594 = vmatpush.msra.mxu0 %v1593
    %v1595 = vand.u32 %v875, 4294901760
    %1596 = vmatpush.msra.mxu0 %v1595
    %v1597 = vand.u32 %v874, 4294901760
    %1598 = vmatpush.msra.mxu0 %v1597
    %v1599 = vand.u32 %v873, 4294901760
    %1600 = vmatpush.msra.mxu0 %v1599
    %v1601 = vand.u32 %v872, 4294901760
    %1602 = vmatpush.msra.mxu0 %v1601
    %v1603 = vand.u32 %v871, 4294901760
    %1604 = vmatpush.msra.mxu0 %v1603
    %v1605 = vand.u32 %v870, 4294901760
    %1606 = vmatpush.msra.mxu0 %v1605
    %v1607 = vand.u32 %v869, 4294901760
    %1608 = vmatpush.msra.mxu0 %v1607
    %v1609 = vand.u32 %v868, 4294901760
    %1610 = vmatpush.msra.mxu0 %v1609
    %v1611 = vand.u32 %v867, 4294901760
    %1612 = vmatpush.msra.mxu0 %v1611
    %v1613 = vand.u32 %v151, 4294901760
    %v1614 = vsub.f32 %v151, %v1613
    %v1615 = vand.u32 %v1614, 4294901760
    %v1616 = vsub.f32 %v1614, %v1615
    %v1617 = vand.u32 %v1616, 4294901760
    %1618 = vmatmul.f32.gmra.mxu0 %v1617
    %v1619 = vpop.f32.mrf.mxu0
    %v1620 = vadd.f32 0.0, %v1619
    %1621 = vdwg.mxu0
    %v1622 = vand.u32 %v882, 4294901760
    %v1623 = vsub.f32 %v882, %v1622
    %v1624 = vand.u32 %v1623, 4294901760
    %v1625 = vsub.f32 %v1623, %v1624
    %v1626 = vand.u32 %v1625, 4294901760
    %1627 = vmatpush.msra.mxu0 %v1626
    %v1628 = vand.u32 %v881, 4294901760
    %v1629 = vsub.f32 %v881, %v1628
    %v1630 = vand.u32 %v1629, 4294901760
    %v1631 = vsub.f32 %v1629, %v1630
    %v1632 = vand.u32 %v1631, 4294901760
    %1633 = vmatpush.msra.mxu0 %v1632
    %v1634 = vand.u32 %v880, 4294901760
    %v1635 = vsub.f32 %v880, %v1634
    %v1636 = vand.u32 %v1635, 4294901760
    %v1637 = vsub.f32 %v1635, %v1636
    %v1638 = vand.u32 %v1637, 4294901760
    %1639 = vmatpush.msra.mxu0 %v1638
    %v1640 = vand.u32 %v879, 4294901760
    %v1641 = vsub.f32 %v879, %v1640
    %v1642 = vand.u32 %v1641, 4294901760
    %v1643 = vsub.f32 %v1641, %v1642
    %v1644 = vand.u32 %v1643, 4294901760
    %1645 = vmatpush.msra.mxu0 %v1644
    %v1646 = vand.u32 %v878, 4294901760
    %v1647 = vsub.f32 %v878, %v1646
    %v1648 = vand.u32 %v1647, 4294901760
    %v1649 = vsub.f32 %v1647, %v1648
    %v1650 = vand.u32 %v1649, 4294901760
    %1651 = vmatpush.msra.mxu0 %v1650
    %v1652 = vand.u32 %v877, 4294901760
    %v1653 = vsub.f32 %v877, %v1652
    %v1654 = vand.u32 %v1653, 4294901760
    %v1655 = vsub.f32 %v1653, %v1654
    %v1656 = vand.u32 %v1655, 4294901760
    %1657 = vmatpush.msra.mxu0 %v1656
    %v1658 = vand.u32 %v876, 4294901760
    %v1659 = vsub.f32 %v876, %v1658
    %v1660 = vand.u32 %v1659, 4294901760
    %v1661 = vsub.f32 %v1659, %v1660
    %v1662 = vand.u32 %v1661, 4294901760
    %1663 = vmatpush.msra.mxu0 %v1662
    %v1664 = vand.u32 %v875, 4294901760
    %v1665 = vsub.f32 %v875, %v1664
    %v1666 = vand.u32 %v1665, 4294901760
    %v1667 = vsub.f32 %v1665, %v1666
    %v1668 = vand.u32 %v1667, 4294901760
    %1669 = vmatpush.msra.mxu0 %v1668
    %v1670 = vand.u32 %v874, 4294901760
    %v1671 = vsub.f32 %v874, %v1670
    %v1672 = vand.u32 %v1671, 4294901760
    %v1673 = vsub.f32 %v1671, %v1672
    %v1674 = vand.u32 %v1673, 4294901760
    %1675 = vmatpush.msra.mxu0 %v1674
    %v1676 = vand.u32 %v873, 4294901760
    %v1677 = vsub.f32 %v873, %v1676
    %v1678 = vand.u32 %v1677, 4294901760
    %v1679 = vsub.f32 %v1677, %v1678
    %v1680 = vand.u32 %v1679, 4294901760
    %1681 = vmatpush.msra.mxu0 %v1680
    %v1682 = vand.u32 %v872, 4294901760
    %v1683 = vsub.f32 %v872, %v1682
    %v1684 = vand.u32 %v1683, 4294901760
    %v1685 = vsub.f32 %v1683, %v1684
    %v1686 = vand.u32 %v1685, 4294901760
    %1687 = vmatpush.msra.mxu0 %v1686
    %v1688 = vand.u32 %v871, 4294901760
    %v1689 = vsub.f32 %v871, %v1688
    %v1690 = vand.u32 %v1689, 4294901760
    %v1691 = vsub.f32 %v1689, %v1690
    %v1692 = vand.u32 %v1691, 4294901760
    %1693 = vmatpush.msra.mxu0 %v1692
    %v1694 = vand.u32 %v870, 4294901760
    %v1695 = vsub.f32 %v870, %v1694
    %v1696 = vand.u32 %v1695, 4294901760
    %v1697 = vsub.f32 %v1695, %v1696
    %v1698 = vand.u32 %v1697, 4294901760
    %1699 = vmatpush.msra.mxu0 %v1698
    %v1700 = vand.u32 %v869, 4294901760
    %v1701 = vsub.f32 %v869, %v1700
    %v1702 = vand.u32 %v1701, 4294901760
    %v1703 = vsub.f32 %v1701, %v1702
    %v1704 = vand.u32 %v1703, 4294901760
    %1705 = vmatpush.msra.mxu0 %v1704
    %v1706 = vand.u32 %v868, 4294901760
    %v1707 = vsub.f32 %v868, %v1706
    %v1708 = vand.u32 %v1707, 4294901760
    %v1709 = vsub.f32 %v1707, %v1708
    %v1710 = vand.u32 %v1709, 4294901760
    %1711 = vmatpush.msra.mxu0 %v1710
    %v1712 = vand.u32 %v867, 4294901760
    %v1713 = vsub.f32 %v867, %v1712
    %v1714 = vand.u32 %v1713, 4294901760
    %v1715 = vsub.f32 %v1713, %v1714
    %v1716 = vand.u32 %v1715, 4294901760
    %1717 = vmatpush.msra.mxu0 %v1716
    %v1718 = vand.u32 %v151, 4294901760
    %1719 = vmatmul.f32.gmra.mxu0 %v1718
    %v1720 = vpop.f32.mrf.mxu0
    %v1721 = vadd.f32 %v1620, %v1720
    %1722 = vdwg.mxu0
    %v1723 = vand.u32 %v882, 4294901760
    %v1724 = vsub.f32 %v882, %v1723
    %1725 = vmatpush.msra.mxu0 %v1724
    %v1726 = vand.u32 %v881, 4294901760
    %v1727 = vsub.f32 %v881, %v1726
    %1728 = vmatpush.msra.mxu0 %v1727
    %v1729 = vand.u32 %v880, 4294901760
    %v1730 = vsub.f32 %v880, %v1729
    %1731 = vmatpush.msra.mxu0 %v1730
    %v1732 = vand.u32 %v879, 4294901760
    %v1733 = vsub.f32 %v879, %v1732
    %1734 = vmatpush.msra.mxu0 %v1733
    %v1735 = vand.u32 %v878, 4294901760
    %v1736 = vsub.f32 %v878, %v1735
    %1737 = vmatpush.msra.mxu0 %v1736
    %v1738 = vand.u32 %v877, 4294901760
    %v1739 = vsub.f32 %v877, %v1738
    %1740 = vmatpush.msra.mxu0 %v1739
    %v1741 = vand.u32 %v876, 4294901760
    %v1742 = vsub.f32 %v876, %v1741
    %1743 = vmatpush.msra.mxu0 %v1742
    %v1744 = vand.u32 %v875, 4294901760
    %v1745 = vsub.f32 %v875, %v1744
    %1746 = vmatpush.msra.mxu0 %v1745
    %v1747 = vand.u32 %v874, 4294901760
    %v1748 = vsub.f32 %v874, %v1747
    %1749 = vmatpush.msra.mxu0 %v1748
    %v1750 = vand.u32 %v873, 4294901760
    %v1751 = vsub.f32 %v873, %v1750
    %1752 = vmatpush.msra.mxu0 %v1751
    %v1753 = vand.u32 %v872, 4294901760
    %v1754 = vsub.f32 %v872, %v1753
    %1755 = vmatpush.msra.mxu0 %v1754
    %v1756 = vand.u32 %v871, 4294901760
    %v1757 = vsub.f32 %v871, %v1756
    %1758 = vmatpush.msra.mxu0 %v1757
    %v1759 = vand.u32 %v870, 4294901760
    %v1760 = vsub.f32 %v870, %v1759
    %1761 = vmatpush.msra.mxu0 %v1760
    %v1762 = vand.u32 %v869, 4294901760
    %v1763 = vsub.f32 %v869, %v1762
    %1764 = vmatpush.msra.mxu0 %v1763
    %v1765 = vand.u32 %v868, 4294901760
    %v1766 = vsub.f32 %v868, %v1765
    %1767 = vmatpush.msra.mxu0 %v1766
    %v1768 = vand.u32 %v867, 4294901760
    %v1769 = vsub.f32 %v867, %v1768
    %1770 = vmatpush.msra.mxu0 %v1769
    %v1771 = vand.u32 %v151, 4294901760
    %v1772 = vsub.f32 %v151, %v1771
    %1773 = vmatmul.f32.gmra.mxu0 %v1772
    %v1774 = vpop.f32.mrf.mxu0
    %v1775 = vadd.f32 %v1721, %v1774
    %1776 = vdwg.mxu0
    %v1777 = vand.u32 %v882, 4294901760
    %1778 = vmatpush.msra.mxu0 %v1777
    %v1779 = vand.u32 %v881, 4294901760
    %1780 = vmatpush.msra.mxu0 %v1779
    %v1781 = vand.u32 %v880, 4294901760
    %1782 = vmatpush.msra.mxu0 %v1781
    %v1783 = vand.u32 %v879, 4294901760
    %1784 = vmatpush.msra.mxu0 %v1783
    %v1785 = vand.u32 %v878, 4294901760
    %1786 = vmatpush.msra.mxu0 %v1785
    %v1787 = vand.u32 %v877, 4294901760
    %1788 = vmatpush.msra.mxu0 %v1787
    %v1789 = vand.u32 %v876, 4294901760
    %1790 = vmatpush.msra.mxu0 %v1789
    %v1791 = vand.u32 %v875, 4294901760
    %1792 = vmatpush.msra.mxu0 %v1791
    %v1793 = vand.u32 %v874, 4294901760
    %1794 = vmatpush.msra.mxu0 %v1793
    %v1795 = vand.u32 %v873, 4294901760
    %1796 = vmatpush.msra.mxu0 %v1795
    %v1797 = vand.u32 %v872, 4294901760
    %1798 = vmatpush.msra.mxu0 %v1797
    %v1799 = vand.u32 %v871, 4294901760
    %1800 = vmatpush.msra.mxu0 %v1799
    %v1801 = vand.u32 %v870, 4294901760
    %1802 = vmatpush.msra.mxu0 %v1801
    %v1803 = vand.u32 %v869, 4294901760
    %1804 = vmatpush.msra.mxu0 %v1803
    %v1805 = vand.u32 %v868, 4294901760
    %1806 = vmatpush.msra.mxu0 %v1805
    %v1807 = vand.u32 %v867, 4294901760
    %1808 = vmatpush.msra.mxu0 %v1807
    %v1809 = vand.u32 %v151, 4294901760
    %v1810 = vsub.f32 %v151, %v1809
    %v1811 = vand.u32 %v1810, 4294901760
    %1812 = vmatmul.f32.gmra.mxu0 %v1811
    %v1813 = vpop.f32.mrf.mxu0
    %v1814 = vadd.f32 %v1775, %v1813
    %1815 = vdwg.mxu0
    %v1816 = vand.u32 %v882, 4294901760
    %v1817 = vsub.f32 %v882, %v1816
    %v1818 = vand.u32 %v1817, 4294901760
    %1819 = vmatpush.msra.mxu0 %v1818
    %v1820 = vand.u32 %v881, 4294901760
    %v1821 = vsub.f32 %v881, %v1820
    %v1822 = vand.u32 %v1821, 4294901760
    %1823 = vmatpush.msra.mxu0 %v1822
    %v1824 = vand.u32 %v880, 4294901760
    %v1825 = vsub.f32 %v880, %v1824
    %v1826 = vand.u32 %v1825, 4294901760
    %1827 = vmatpush.msra.mxu0 %v1826
    %v1828 = vand.u32 %v879, 4294901760
    %v1829 = vsub.f32 %v879, %v1828
    %v1830 = vand.u32 %v1829, 4294901760
    %1831 = vmatpush.msra.mxu0 %v1830
    %v1832 = vand.u32 %v878, 4294901760
    %v1833 = vsub.f32 %v878, %v1832
    %v1834 = vand.u32 %v1833, 4294901760
    %1835 = vmatpush.msra.mxu0 %v1834
    %v1836 = vand.u32 %v877, 4294901760
    %v1837 = vsub.f32 %v877, %v1836
    %v1838 = vand.u32 %v1837, 4294901760
    %1839 = vmatpush.msra.mxu0 %v1838
    %v1840 = vand.u32 %v876, 4294901760
    %v1841 = vsub.f32 %v876, %v1840
    %v1842 = vand.u32 %v1841, 4294901760
    %1843 = vmatpush.msra.mxu0 %v1842
    %v1844 = vand.u32 %v875, 4294901760
    %v1845 = vsub.f32 %v875, %v1844
    %v1846 = vand.u32 %v1845, 4294901760
    %1847 = vmatpush.msra.mxu0 %v1846
    %v1848 = vand.u32 %v874, 4294901760
    %v1849 = vsub.f32 %v874, %v1848
    %v1850 = vand.u32 %v1849, 4294901760
    %1851 = vmatpush.msra.mxu0 %v1850
    %v1852 = vand.u32 %v873, 4294901760
    %v1853 = vsub.f32 %v873, %v1852
    %v1854 = vand.u32 %v1853, 4294901760
    %1855 = vmatpush.msra.mxu0 %v1854
    %v1856 = vand.u32 %v872, 4294901760
    %v1857 = vsub.f32 %v872, %v1856
    %v1858 = vand.u32 %v1857, 4294901760
    %1859 = vmatpush.msra.mxu0 %v1858
    %v1860 = vand.u32 %v871, 4294901760
    %v1861 = vsub.f32 %v871, %v1860
    %v1862 = vand.u32 %v1861, 4294901760
    %1863 = vmatpush.msra.mxu0 %v1862
    %v1864 = vand.u32 %v870, 4294901760
    %v1865 = vsub.f32 %v870, %v1864
    %v1866 = vand.u32 %v1865, 4294901760
    %1867 = vmatpush.msra.mxu0 %v1866
    %v1868 = vand.u32 %v869, 4294901760
    %v1869 = vsub.f32 %v869, %v1868
    %v1870 = vand.u32 %v1869, 4294901760
    %1871 = vmatpush.msra.mxu0 %v1870
    %v1872 = vand.u32 %v868, 4294901760
    %v1873 = vsub.f32 %v868, %v1872
    %v1874 = vand.u32 %v1873, 4294901760
    %1875 = vmatpush.msra.mxu0 %v1874
    %v1876 = vand.u32 %v867, 4294901760
    %v1877 = vsub.f32 %v867, %v1876
    %v1878 = vand.u32 %v1877, 4294901760
    %1879 = vmatpush.msra.mxu0 %v1878
    %v1880 = vand.u32 %v151, 4294901760
    %1881 = vmatmul.f32.gmra.mxu0 %v1880
    %v1882 = vpop.f32.mrf.mxu0
    %v1883 = vadd.f32 %v1814, %v1882
    %1884 = vdwg.mxu0
    %v1885 = vand.u32 %v882, 4294901760
    %1886 = vmatpush.msra.mxu0 %v1885
    %v1887 = vand.u32 %v881, 4294901760
    %1888 = vmatpush.msra.mxu0 %v1887
    %v1889 = vand.u32 %v880, 4294901760
    %1890 = vmatpush.msra.mxu0 %v1889
    %v1891 = vand.u32 %v879, 4294901760
    %1892 = vmatpush.msra.mxu0 %v1891
    %v1893 = vand.u32 %v878, 4294901760
    %1894 = vmatpush.msra.mxu0 %v1893
    %v1895 = vand.u32 %v877, 4294901760
    %1896 = vmatpush.msra.mxu0 %v1895
    %v1897 = vand.u32 %v876, 4294901760
    %1898 = vmatpush.msra.mxu0 %v1897
    %v1899 = vand.u32 %v875, 4294901760
    %1900 = vmatpush.msra.mxu0 %v1899
    %v1901 = vand.u32 %v874, 4294901760
    %1902 = vmatpush.msra.mxu0 %v1901
    %v1903 = vand.u32 %v873, 4294901760
    %1904 = vmatpush.msra.mxu0 %v1903
    %v1905 = vand.u32 %v872, 4294901760
    %1906 = vmatpush.msra.mxu0 %v1905
    %v1907 = vand.u32 %v871, 4294901760
    %1908 = vmatpush.msra.mxu0 %v1907
    %v1909 = vand.u32 %v870, 4294901760
    %1910 = vmatpush.msra.mxu0 %v1909
    %v1911 = vand.u32 %v869, 4294901760
    %1912 = vmatpush.msra.mxu0 %v1911
    %v1913 = vand.u32 %v868, 4294901760
    %1914 = vmatpush.msra.mxu0 %v1913
    %v1915 = vand.u32 %v867, 4294901760
    %1916 = vmatpush.msra.mxu0 %v1915
    %v1917 = vand.u32 %v151, 4294901760
    %1918 = vmatmul.f32.gmra.mxu0 %v1917
    %v1919 = vpop.f32.mrf.mxu0
    %v1920 = vadd.f32 %v1883, %v1919
    %1921 = vdwg.mxu0
    %v1922 = vand.u32 %v898, 4294901760
    %1923 = vmatpush.msra.mxu0 %v1922
    %v1924 = vand.u32 %v897, 4294901760
    %1925 = vmatpush.msra.mxu0 %v1924
    %v1926 = vand.u32 %v896, 4294901760
    %1927 = vmatpush.msra.mxu0 %v1926
    %v1928 = vand.u32 %v895, 4294901760
    %1929 = vmatpush.msra.mxu0 %v1928
    %v1930 = vand.u32 %v894, 4294901760
    %1931 = vmatpush.msra.mxu0 %v1930
    %v1932 = vand.u32 %v893, 4294901760
    %1933 = vmatpush.msra.mxu0 %v1932
    %v1934 = vand.u32 %v892, 4294901760
    %1935 = vmatpush.msra.mxu0 %v1934
    %v1936 = vand.u32 %v891, 4294901760
    %1937 = vmatpush.msra.mxu0 %v1936
    %v1938 = vand.u32 %v890, 4294901760
    %1939 = vmatpush.msra.mxu0 %v1938
    %v1940 = vand.u32 %v889, 4294901760
    %1941 = vmatpush.msra.mxu0 %v1940
    %v1942 = vand.u32 %v888, 4294901760
    %1943 = vmatpush.msra.mxu0 %v1942
    %v1944 = vand.u32 %v887, 4294901760
    %1945 = vmatpush.msra.mxu0 %v1944
    %v1946 = vand.u32 %v886, 4294901760
    %1947 = vmatpush.msra.mxu0 %v1946
    %v1948 = vand.u32 %v885, 4294901760
    %1949 = vmatpush.msra.mxu0 %v1948
    %v1950 = vand.u32 %v884, 4294901760
    %1951 = vmatpush.msra.mxu0 %v1950
    %v1952 = vand.u32 %v883, 4294901760
    %1953 = vmatpush.msra.mxu0 %v1952
    %v1954 = vand.u32 %v152, 4294901760
    %v1955 = vsub.f32 %v152, %v1954
    %v1956 = vand.u32 %v1955, 4294901760
    %v1957 = vsub.f32 %v1955, %v1956
    %v1958 = vand.u32 %v1957, 4294901760
    %1959 = vmatmul.f32.gmra.mxu0 %v1958
    %v1960 = vpop.f32.mrf.mxu0
    %v1961 = vadd.f32 %v1920, %v1960
    %1962 = vdwg.mxu0
    %v1963 = vand.u32 %v898, 4294901760
    %v1964 = vsub.f32 %v898, %v1963
    %v1965 = vand.u32 %v1964, 4294901760
    %v1966 = vsub.f32 %v1964, %v1965
    %v1967 = vand.u32 %v1966, 4294901760
    %1968 = vmatpush.msra.mxu0 %v1967
    %v1969 = vand.u32 %v897, 4294901760
    %v1970 = vsub.f32 %v897, %v1969
    %v1971 = vand.u32 %v1970, 4294901760
    %v1972 = vsub.f32 %v1970, %v1971
    %v1973 = vand.u32 %v1972, 4294901760
    %1974 = vmatpush.msra.mxu0 %v1973
    %v1975 = vand.u32 %v896, 4294901760
    %v1976 = vsub.f32 %v896, %v1975
    %v1977 = vand.u32 %v1976, 4294901760
    %v1978 = vsub.f32 %v1976, %v1977
    %v1979 = vand.u32 %v1978, 4294901760
    %1980 = vmatpush.msra.mxu0 %v1979
    %v1981 = vand.u32 %v895, 4294901760
    %v1982 = vsub.f32 %v895, %v1981
    %v1983 = vand.u32 %v1982, 4294901760
    %v1984 = vsub.f32 %v1982, %v1983
    %v1985 = vand.u32 %v1984, 4294901760
    %1986 = vmatpush.msra.mxu0 %v1985
    %v1987 = vand.u32 %v894, 4294901760
    %v1988 = vsub.f32 %v894, %v1987
    %v1989 = vand.u32 %v1988, 4294901760
    %v1990 = vsub.f32 %v1988, %v1989
    %v1991 = vand.u32 %v1990, 4294901760
    %1992 = vmatpush.msra.mxu0 %v1991
    %v1993 = vand.u32 %v893, 4294901760
    %v1994 = vsub.f32 %v893, %v1993
    %v1995 = vand.u32 %v1994, 4294901760
    %v1996 = vsub.f32 %v1994, %v1995
    %v1997 = vand.u32 %v1996, 4294901760
    %1998 = vmatpush.msra.mxu0 %v1997
    %v1999 = vand.u32 %v892, 4294901760
    %v2000 = vsub.f32 %v892, %v1999
    %v2001 = vand.u32 %v2000, 4294901760
    %v2002 = vsub.f32 %v2000, %v2001
    %v2003 = vand.u32 %v2002, 4294901760
    %2004 = vmatpush.msra.mxu0 %v2003
    %v2005 = vand.u32 %v891, 4294901760
    %v2006 = vsub.f32 %v891, %v2005
    %v2007 = vand.u32 %v2006, 4294901760
    %v2008 = vsub.f32 %v2006, %v2007
    %v2009 = vand.u32 %v2008, 4294901760
    %2010 = vmatpush.msra.mxu0 %v2009
    %v2011 = vand.u32 %v890, 4294901760
    %v2012 = vsub.f32 %v890, %v2011
    %v2013 = vand.u32 %v2012, 4294901760
    %v2014 = vsub.f32 %v2012, %v2013
    %v2015 = vand.u32 %v2014, 4294901760
    %2016 = vmatpush.msra.mxu0 %v2015
    %v2017 = vand.u32 %v889, 4294901760
    %v2018 = vsub.f32 %v889, %v2017
    %v2019 = vand.u32 %v2018, 4294901760
    %v2020 = vsub.f32 %v2018, %v2019
    %v2021 = vand.u32 %v2020, 4294901760
    %2022 = vmatpush.msra.mxu0 %v2021
    %v2023 = vand.u32 %v888, 4294901760
    %v2024 = vsub.f32 %v888, %v2023
    %v2025 = vand.u32 %v2024, 4294901760
    %v2026 = vsub.f32 %v2024, %v2025
    %v2027 = vand.u32 %v2026, 4294901760
    %2028 = vmatpush.msra.mxu0 %v2027
    %v2029 = vand.u32 %v887, 4294901760
    %v2030 = vsub.f32 %v887, %v2029
    %v2031 = vand.u32 %v2030, 4294901760
    %v2032 = vsub.f32 %v2030, %v2031
    %v2033 = vand.u32 %v2032, 4294901760
    %2034 = vmatpush.msra.mxu0 %v2033
    %v2035 = vand.u32 %v886, 4294901760
    %v2036 = vsub.f32 %v886, %v2035
    %v2037 = vand.u32 %v2036, 4294901760
    %v2038 = vsub.f32 %v2036, %v2037
    %v2039 = vand.u32 %v2038, 4294901760
    %2040 = vmatpush.msra.mxu0 %v2039
    %v2041 = vand.u32 %v885, 4294901760
    %v2042 = vsub.f32 %v885, %v2041
    %v2043 = vand.u32 %v2042, 4294901760
    %v2044 = vsub.f32 %v2042, %v2043
    %v2045 = vand.u32 %v2044, 4294901760
    %2046 = vmatpush.msra.mxu0 %v2045
    %v2047 = vand.u32 %v884, 4294901760
    %v2048 = vsub.f32 %v884, %v2047
    %v2049 = vand.u32 %v2048, 4294901760
    %v2050 = vsub.f32 %v2048, %v2049
    %v2051 = vand.u32 %v2050, 4294901760
    %2052 = vmatpush.msra.mxu0 %v2051
    %v2053 = vand.u32 %v883, 4294901760
    %v2054 = vsub.f32 %v883, %v2053
    %v2055 = vand.u32 %v2054, 4294901760
    %v2056 = vsub.f32 %v2054, %v2055
    %v2057 = vand.u32 %v2056, 4294901760
    %2058 = vmatpush.msra.mxu0 %v2057
    %v2059 = vand.u32 %v152, 4294901760
    %2060 = vmatmul.f32.gmra.mxu0 %v2059
    %v2061 = vpop.f32.mrf.mxu0
    %v2062 = vadd.f32 %v1961, %v2061
    %2063 = vdwg.mxu0
    %v2064 = vand.u32 %v898, 4294901760
    %v2065 = vsub.f32 %v898, %v2064
    %2066 = vmatpush.msra.mxu0 %v2065
    %v2067 = vand.u32 %v897, 4294901760
    %v2068 = vsub.f32 %v897, %v2067
    %2069 = vmatpush.msra.mxu0 %v2068
    %v2070 = vand.u32 %v896, 4294901760
    %v2071 = vsub.f32 %v896, %v2070
    %2072 = vmatpush.msra.mxu0 %v2071
    %v2073 = vand.u32 %v895, 4294901760
    %v2074 = vsub.f32 %v895, %v2073
    %2075 = vmatpush.msra.mxu0 %v2074
    %v2076 = vand.u32 %v894, 4294901760
    %v2077 = vsub.f32 %v894, %v2076
    %2078 = vmatpush.msra.mxu0 %v2077
    %v2079 = vand.u32 %v893, 4294901760
    %v2080 = vsub.f32 %v893, %v2079
    %2081 = vmatpush.msra.mxu0 %v2080
    %v2082 = vand.u32 %v892, 4294901760
    %v2083 = vsub.f32 %v892, %v2082
    %2084 = vmatpush.msra.mxu0 %v2083
    %v2085 = vand.u32 %v891, 4294901760
    %v2086 = vsub.f32 %v891, %v2085
    %2087 = vmatpush.msra.mxu0 %v2086
    %v2088 = vand.u32 %v890, 4294901760
    %v2089 = vsub.f32 %v890, %v2088
    %2090 = vmatpush.msra.mxu0 %v2089
    %v2091 = vand.u32 %v889, 4294901760
    %v2092 = vsub.f32 %v889, %v2091
    %2093 = vmatpush.msra.mxu0 %v2092
    %v2094 = vand.u32 %v888, 4294901760
    %v2095 = vsub.f32 %v888, %v2094
    %2096 = vmatpush.msra.mxu0 %v2095
    %v2097 = vand.u32 %v887, 4294901760
    %v2098 = vsub.f32 %v887, %v2097
    %2099 = vmatpush.msra.mxu0 %v2098
    %v2100 = vand.u32 %v886, 4294901760
    %v2101 = vsub.f32 %v886, %v2100
    %2102 = vmatpush.msra.mxu0 %v2101
    %v2103 = vand.u32 %v885, 4294901760
    %v2104 = vsub.f32 %v885, %v2103
    %2105 = vmatpush.msra.mxu0 %v2104
    %v2106 = vand.u32 %v884, 4294901760
    %v2107 = vsub.f32 %v884, %v2106
    %2108 = vmatpush.msra.mxu0 %v2107
    %v2109 = vand.u32 %v883, 4294901760
    %v2110 = vsub.f32 %v883, %v2109
    %2111 = vmatpush.msra.mxu0 %v2110
    %v2112 = vand.u32 %v152, 4294901760
    %v2113 = vsub.f32 %v152, %v2112
    %2114 = vmatmul.f32.gmra.mxu0 %v2113
    %v2115 = vpop.f32.mrf.mxu0
    %v2116 = vadd.f32 %v2062, %v2115
    %2117 = vdwg.mxu0
    %v2118 = vand.u32 %v898, 4294901760
    %2119 = vmatpush.msra.mxu0 %v2118
    %v2120 = vand.u32 %v897, 4294901760
    %2121 = vmatpush.msra.mxu0 %v2120
    %v2122 = vand.u32 %v896, 4294901760
    %2123 = vmatpush.msra.mxu0 %v2122
    %v2124 = vand.u32 %v895, 4294901760
    %2125 = vmatpush.msra.mxu0 %v2124
    %v2126 = vand.u32 %v894, 4294901760
    %2127 = vmatpush.msra.mxu0 %v2126
    %v2128 = vand.u32 %v893, 4294901760
    %2129 = vmatpush.msra.mxu0 %v2128
    %v2130 = vand.u32 %v892, 4294901760
    %2131 = vmatpush.msra.mxu0 %v2130
    %v2132 = vand.u32 %v891, 4294901760
    %2133 = vmatpush.msra.mxu0 %v2132
    %v2134 = vand.u32 %v890, 4294901760
    %2135 = vmatpush.msra.mxu0 %v2134
    %v2136 = vand.u32 %v889, 4294901760
    %2137 = vmatpush.msra.mxu0 %v2136
    %v2138 = vand.u32 %v888, 4294901760
    %2139 = vmatpush.msra.mxu0 %v2138
    %v2140 = vand.u32 %v887, 4294901760
    %2141 = vmatpush.msra.mxu0 %v2140
    %v2142 = vand.u32 %v886, 4294901760
    %2143 = vmatpush.msra.mxu0 %v2142
    %v2144 = vand.u32 %v885, 4294901760
    %2145 = vmatpush.msra.mxu0 %v2144
    %v2146 = vand.u32 %v884, 4294901760
    %2147 = vmatpush.msra.mxu0 %v2146
    %v2148 = vand.u32 %v883, 4294901760
    %2149 = vmatpush.msra.mxu0 %v2148
    %v2150 = vand.u32 %v152, 4294901760
    %v2151 = vsub.f32 %v152, %v2150
    %v2152 = vand.u32 %v2151, 4294901760
    %2153 = vmatmul.f32.gmra.mxu0 %v2152
    %v2154 = vpop.f32.mrf.mxu0
    %v2155 = vadd.f32 %v2116, %v2154
    %2156 = vdwg.mxu0
    %v2157 = vand.u32 %v898, 4294901760
    %v2158 = vsub.f32 %v898, %v2157
    %v2159 = vand.u32 %v2158, 4294901760
    %2160 = vmatpush.msra.mxu0 %v2159
    %v2161 = vand.u32 %v897, 4294901760
    %v2162 = vsub.f32 %v897, %v2161
    %v2163 = vand.u32 %v2162, 4294901760
    %2164 = vmatpush.msra.mxu0 %v2163
    %v2165 = vand.u32 %v896, 4294901760
    %v2166 = vsub.f32 %v896, %v2165
    %v2167 = vand.u32 %v2166, 4294901760
    %2168 = vmatpush.msra.mxu0 %v2167
    %v2169 = vand.u32 %v895, 4294901760
    %v2170 = vsub.f32 %v895, %v2169
    %v2171 = vand.u32 %v2170, 4294901760
    %2172 = vmatpush.msra.mxu0 %v2171
    %v2173 = vand.u32 %v894, 4294901760
    %v2174 = vsub.f32 %v894, %v2173
    %v2175 = vand.u32 %v2174, 4294901760
    %2176 = vmatpush.msra.mxu0 %v2175
    %v2177 = vand.u32 %v893, 4294901760
    %v2178 = vsub.f32 %v893, %v2177
    %v2179 = vand.u32 %v2178, 4294901760
    %2180 = vmatpush.msra.mxu0 %v2179
    %v2181 = vand.u32 %v892, 4294901760
    %v2182 = vsub.f32 %v892, %v2181
    %v2183 = vand.u32 %v2182, 4294901760
    %2184 = vmatpush.msra.mxu0 %v2183
    %v2185 = vand.u32 %v891, 4294901760
    %v2186 = vsub.f32 %v891, %v2185
    %v2187 = vand.u32 %v2186, 4294901760
    %2188 = vmatpush.msra.mxu0 %v2187
    %v2189 = vand.u32 %v890, 4294901760
    %v2190 = vsub.f32 %v890, %v2189
    %v2191 = vand.u32 %v2190, 4294901760
    %2192 = vmatpush.msra.mxu0 %v2191
    %v2193 = vand.u32 %v889, 4294901760
    %v2194 = vsub.f32 %v889, %v2193
    %v2195 = vand.u32 %v2194, 4294901760
    %2196 = vmatpush.msra.mxu0 %v2195
    %v2197 = vand.u32 %v888, 4294901760
    %v2198 = vsub.f32 %v888, %v2197
    %v2199 = vand.u32 %v2198, 4294901760
    %2200 = vmatpush.msra.mxu0 %v2199
    %v2201 = vand.u32 %v887, 4294901760
    %v2202 = vsub.f32 %v887, %v2201
    %v2203 = vand.u32 %v2202, 4294901760
    %2204 = vmatpush.msra.mxu0 %v2203
    %v2205 = vand.u32 %v886, 4294901760
    %v2206 = vsub.f32 %v886, %v2205
    %v2207 = vand.u32 %v2206, 4294901760
    %2208 = vmatpush.msra.mxu0 %v2207
    %v2209 = vand.u32 %v885, 4294901760
    %v2210 = vsub.f32 %v885, %v2209
    %v2211 = vand.u32 %v2210, 4294901760
    %2212 = vmatpush.msra.mxu0 %v2211
    %v2213 = vand.u32 %v884, 4294901760
    %v2214 = vsub.f32 %v884, %v2213
    %v2215 = vand.u32 %v2214, 4294901760
    %2216 = vmatpush.msra.mxu0 %v2215
    %v2217 = vand.u32 %v883, 4294901760
    %v2218 = vsub.f32 %v883, %v2217
    %v2219 = vand.u32 %v2218, 4294901760
    %2220 = vmatpush.msra.mxu0 %v2219
    %v2221 = vand.u32 %v152, 4294901760
    %2222 = vmatmul.f32.gmra.mxu0 %v2221
    %v2223 = vpop.f32.mrf.mxu0
    %v2224 = vadd.f32 %v2155, %v2223
    %2225 = vdwg.mxu0
    %v2226 = vand.u32 %v898, 4294901760
    %2227 = vmatpush.msra.mxu0 %v2226
    %v2228 = vand.u32 %v897, 4294901760
    %2229 = vmatpush.msra.mxu0 %v2228
    %v2230 = vand.u32 %v896, 4294901760
    %2231 = vmatpush.msra.mxu0 %v2230
    %v2232 = vand.u32 %v895, 4294901760
    %2233 = vmatpush.msra.mxu0 %v2232
    %v2234 = vand.u32 %v894, 4294901760
    %2235 = vmatpush.msra.mxu0 %v2234
    %v2236 = vand.u32 %v893, 4294901760
    %2237 = vmatpush.msra.mxu0 %v2236
    %v2238 = vand.u32 %v892, 4294901760
    %2239 = vmatpush.msra.mxu0 %v2238
    %v2240 = vand.u32 %v891, 4294901760
    %2241 = vmatpush.msra.mxu0 %v2240
    %v2242 = vand.u32 %v890, 4294901760
    %2243 = vmatpush.msra.mxu0 %v2242
    %v2244 = vand.u32 %v889, 4294901760
    %2245 = vmatpush.msra.mxu0 %v2244
    %v2246 = vand.u32 %v888, 4294901760
    %2247 = vmatpush.msra.mxu0 %v2246
    %v2248 = vand.u32 %v887, 4294901760
    %2249 = vmatpush.msra.mxu0 %v2248
    %v2250 = vand.u32 %v886, 4294901760
    %2251 = vmatpush.msra.mxu0 %v2250
    %v2252 = vand.u32 %v885, 4294901760
    %2253 = vmatpush.msra.mxu0 %v2252
    %v2254 = vand.u32 %v884, 4294901760
    %2255 = vmatpush.msra.mxu0 %v2254
    %v2256 = vand.u32 %v883, 4294901760
    %2257 = vmatpush.msra.mxu0 %v2256
    %v2258 = vand.u32 %v152, 4294901760
    %2259 = vmatmul.f32.gmra.mxu0 %v2258
    %v2260 = vpop.f32.mrf.mxu0
    %v2261 = vadd.f32 %v2224, %v2260
    %2262 = vdwg.mxu0
    %v2263 = vmul.f32 %v865, %v1579
    %vm2264 = vcmask 261120
    %v2265 = vsel %vm2264, %v2263, 0.0
    %2266 = vadd.xlane.f32.xlu0 %v2265
    %v2267 = vpop.xlane.xlu0 %2266
    %v2268 = vmul.f32 %v865, %v2261
    %v2269 = vsel %vm2264, %v2268, 0.0
    %2270 = vadd.xlane.f32.xlu0 %v2269
    %v2271 = vpop.xlane.xlu0 %2270
    %v2272 = vmin.f32 %v2267, 0.0
    %v2273 = vand.u32 2147483647, %v2267
    %v2274 = vsub.f32 0.0, %v2273
    %v2275 = vmul.f32 %v2274, 1.442695
    %v2276 = vpow.pop %v2275
    %v2277 = vadd.f32 %v2276, 1.0
    %v2278 = vlog2.pop %v2277
    %v2279 = vmul.f32 %v2278, 0.6931472
    %v2280 = vmul.f32 -0.5, %v2276
    %v2281 = vadd.f32 %v2280, 1.0
    %v2282 = vmul.f32 %v2281, %v2276
    %v2283 = vand.u32 2147483647, %v2276
    %vm2284 = vcmp.lt.f32.partialorder %v2283, 0.0004427343
    %v2285 = vsel %vm2284, %v2282, %v2279
    %v2286 = vsub.f32 %v2272, %v2285
    %v2287 = vsub.f32 0.0, %v2271
    %v2288 = vmin.f32 %v2287, 0.0
    %v2289 = vand.u32 2147483647, %v2287
    %v2290 = vsub.f32 0.0, %v2289
    %v2291 = vmul.f32 %v2290, 1.442695
    %v2292 = vpow.pop %v2291
    %v2293 = vadd.f32 %v2292, 1.0
    %v2294 = vlog2.pop %v2293
    %v2295 = vmul.f32 %v2294, 0.6931472
    %v2296 = vmul.f32 -0.5, %v2292
    %v2297 = vadd.f32 %v2296, 1.0
    %v2298 = vmul.f32 %v2297, %v2292
    %v2299 = vand.u32 2147483647, %v2292
    %vm2300 = vcmp.lt.f32.partialorder %v2299, 0.0004427343
    %v2301 = vsel %vm2300, %v2298, %v2295
    %v2302 = vsub.f32 %v2288, %v2301
    %v2303 = vadd.f32 %v2286, %v2302
    %v2304 = vrot.slane %v2303, 4
    %v2305 = vadd.f32 %v2303, %v2304
    %v2306 = vrot.slane %v2305, 2
    %v2307 = vadd.f32 %v2305, %v2306
    %v2308 = vrot.slane %v2307, 1
    %v2309 = vadd.f32 %v2307, %v2308
    %v2310 = vsub.f32 0.0, %v2309
    %vm2311 = vcmask 0
    %2312 = vst.msk [vmem:[#allocation2] sm:$0x1] %vm2311, %v2310
    // Predicated region
    $region22: #{tpu_custom_call.1} parent=1 // pred_check
      _
    $region23: #{tpu_custom_call.1} parent=1 // pred_check_branch
      %2314 = sbr.rel (0) target = $region25
    $region24: #{tpu_custom_call.1} parent=1 // pred_region
      %2316 = vsyncadd [#allocation3], 0
      %s2318 = sshll.u32 [#allocation2], 4
      %s2319 = int_to_ptr.vmem [resolvable:$true] %s2318
      %s2320 = sshll.u32 %s5, 4
      %s2321 = int_to_ptr.hbm [resolvable:$true] %s2320
      %2323 = dma.vmem_to_hbm [thread:$0]  %s2319, 16, %s2321, [#allocation3]
    $region25: #{tpu_custom_call.1} parent=1 // pred_fallthru
      _
    // Predicated region
    $region26: #{tpu_custom_call.1} parent=1 // pred_check
      _
    $region27: #{tpu_custom_call.1} parent=1 // pred_check_branch
      %2325 = sbr.rel (0) target = $region29
    $region28: #{tpu_custom_call.1} parent=1 // pred_region
      %2327 = dma.done [#allocation3], 16
    $region29: #{tpu_custom_call.1} parent=1 // pred_fallthru
      _
    %2328 = vsyncpa [#allocation3], 1

</llo_original>
